<compile_context>
chip_gen: v6e
topology: v6e:2x2x1
jax: 0.10.0
libtpu: 0.0.40
codegen_flags: <defaults>
</compile_context>

<pallas_src>
import jax
import jax.numpy as jnp
from jax.experimental import pallas as pl
from jax.experimental.pallas import tpu as pltpu


# ----------------------------------------------------------------------------
# Fused kernel: the whole chain of coupling bijectors, normalizing direction.
#
# Per block n (swap alternates statically):
#   xc, xt = halves of z
#   h  = tanh(xc @ W1[n] + b1[n])               (TB, H)
#   s  = tanh(h  @ W2s[n] + b2s[n])             (TB, dh)
#   t  =       h @ W2t[n] + b2t[n]              (TB, dh)
#   zt = (xt - t) * exp(-s)
#   log|det J|_n = -sum(s, axis=-1)
# ----------------------------------------------------------------------------
def _make_fused_flow_kernel(swaps, dh):
    n_blocks = len(swaps)

    def kernel(z_ref, w1_ref, b1_ref, w2s_ref, w2t_ref, b2s_ref, b2t_ref,
               z_out_ref, ld_ref):
        tb = z_ref.shape[0]
        z = z_ref[...]                       # (TB, D): whole tile in vregs
        left, right = z[:, :dh], z[:, dh:]   # split once; halves stay in vregs
        ld_cols = []

        # Statically unrolled per-bijector loop: z never round-trips through
        # HBM between layers; biases are read via static slices b*_ref[n]
        # (no per-iteration broadcast re-materialization).
        for n in range(n_blocks):
            if swaps[n]:
                xc, xt = right, left
            else:
                xc, xt = left, right
            # Conditioner MLP (MXU matmuls, f32 accumulate).  At dh=4 / H=32
            # these are VPU-scale; cast operands to bf16 only if scaled up.
            h = jnp.tanh(
                jnp.dot(xc, w1_ref[n], preferred_element_type=jnp.float32)
                + b1_ref[n])
            s = jnp.tanh(
                jnp.dot(h, w2s_ref[n], preferred_element_type=jnp.float32)
                + b2s_ref[n])
            t = (jnp.dot(h, w2t_ref[n], preferred_element_type=jnp.float32)
                 + b2t_ref[n])
            zt = (xt - t) * jnp.exp(-s)
            ld_cols.append(-jnp.sum(s, axis=1, keepdims=True))   # (TB, 1)
            if swaps[n]:
                left = zt
            else:
                right = zt

        # Write z once per batch tile (two static-slice stores; D is the full
        # lane extent of the output, so this is as lane-dense as D allows).
        z_out_ref[:, :dh] = left
        z_out_ref[:, dh:] = right

        # Assemble all per-block log-dets into one (TB, n_blocks) tile and
        # store once instead of n_blocks width-1 partial stores.
        col = jax.lax.broadcasted_iota(jnp.int32, (tb, n_blocks), 1)
        ld_tile = jnp.zeros((tb, n_blocks), jnp.float32)
        for n in range(n_blocks):
            ld_tile = jnp.where(col == n, ld_cols[n], ld_tile)
        ld_ref[...] = ld_tile

    return kernel


def fused_coupling_flow(z, w1, b1, w2s, w2t, b2s, b2t, swaps, *, block_b=512):
    """Run the whole chain of coupling bijectors in ONE pallas_call.

    z    : (B, D) float32
    w1   : (N, dh, H)    b1  : (N, 1, H)
    w2s  : (N, H, dh)    b2s : (N, 1, dh)
    w2t  : (N, H, dh)    b2t : (N, 1, dh)
    swaps: static tuple of bool, one per bijector.
    Returns (z_out (B, D), log_dets (B, N)).
    """
    B, D = z.shape
    n_blocks, dh, _hidden = w1.shape
    assert D == 2 * dh and n_blocks == len(swaps)

    # Batch tile: whole batch when small; otherwise a sublane-aligned tile so
    # Pallas double-buffers HBM->VMEM across grid steps.
    if B <= block_b or B % block_b != 0:
        tb = B
    else:
        tb = block_b
    grid = (B // tb,)

    def const_spec(shp):
        # weights/biases: whole-array block, constant index -> stay resident
        # in VMEM across all batch-tile grid steps.
        return pl.BlockSpec(shp, lambda i: (0,) * len(shp))

    z_out, ld = pl.pallas_call(
        _make_fused_flow_kernel(tuple(swaps), dh),
        out_shape=(
            jax.ShapeDtypeStruct((B, D), jnp.float32),
            jax.ShapeDtypeStruct((B, n_blocks), jnp.float32),
        ),
        grid=grid,
        in_specs=[
            pl.BlockSpec((tb, D), lambda i: (i, 0)),   # z, batch-tiled
            const_spec(w1.shape),                      # (N, dh, H)
            const_spec(b1.shape),                      # (N, 1, H)
            const_spec(w2s.shape),                     # (N, H, dh)
            const_spec(w2t.shape),                     # (N, H, dh)
            const_spec(b2s.shape),                     # (N, 1, dh)
            const_spec(b2t.shape),                     # (N, 1, dh)
        ],
        out_specs=(
            pl.BlockSpec((tb, D), lambda i: (i, 0)),
            pl.BlockSpec((tb, n_blocks), lambda i: (i, 0)),
        ),
        compiler_params=pltpu.CompilerParams(
            # batch tiles are independent -> v7x can shard over both TCs;
            # harmless no-op on single-TC v5e / v6e.
            dimension_semantics=("parallel",),
        ),
    )(z, w1, b1, w2s, w2t, b2s, b2t)
    return z_out, ld


# ----------------------------------------------------------------------------
# Bijector and NormalizingFlow container (glue is plain Python/JAX)
# ----------------------------------------------------------------------------
class AffineCouplingBijector:
    """RealNVP-style coupling layer with a 2-layer MLP conditioner."""

    normalizing_direction = True  # NormalizingFlow.forward calls .inverse()

    def __init__(self, dim, hidden, swap, key):
        assert dim % 2 == 0
        self.dim = dim
        self.dh = dim // 2
        self.hidden = hidden
        self.swap = bool(swap)
        k1, k2, k3, k4, k5, k6 = jax.random.split(key, 6)
        self.w1 = 0.1 * jax.random.normal(k1, (self.dh, hidden), jnp.float32)
        self.b1 = 0.05 * jax.random.normal(k4, (hidden,), jnp.float32)
        # W2 kept split into scale / shift heads so the kernel never slices
        # an MXU result along the lane axis at a non-128 boundary.
        self.w2_s = 0.1 * jax.random.normal(k2, (hidden, self.dh), jnp.float32)
        self.w2_t = 0.1 * jax.random.normal(k3, (hidden, self.dh), jnp.float32)
        self.b2_s = 0.05 * jax.random.normal(k5, (self.dh,), jnp.float32)
        self.b2_t = 0.05 * jax.random.normal(k6, (self.dh,), jnp.float32)

    def inverse(self, z):
        """Normalizing direction, pure-JAX reference path (per-bijector)."""
        dh = self.dh
        if self.swap:
            xc, xt = z[:, dh:], z[:, :dh]
        else:
            xc, xt = z[:, :dh], z[:, dh:]
        hp = jax.lax.Precision.HIGHEST
        h = jnp.tanh(jnp.dot(xc, self.w1, precision=hp) + self.b1)
        s = jnp.tanh(jnp.dot(h, self.w2_s, precision=hp) + self.b2_s)
        t = jnp.dot(h, self.w2_t, precision=hp) + self.b2_t
        zt = (xt - t) * jnp.exp(-s)
        log_abs_det = -jnp.sum(s, axis=1)
        if self.swap:
            z_out = jnp.concatenate([zt, xc], axis=1)
        else:
            z_out = jnp.concatenate([xc, zt], axis=1)
        return z_out, log_abs_det

    def forward(self, z):
        # TODO(synk): generative (sampling) direction not needed for
        # NormalizingFlow.forward() when normalizing_direction=True.
        raise NotImplementedError


class NormalizingFlow:
    """Mirror of the PyTorch NormalizingFlow container semantics.

    forward() chains bijector.inverse() (normalizing direction) exactly like
    the PyTorch module, but all coupling bijectors are fused into a single
    Pallas kernel so z and all weights stay resident in VMEM.
    """

    def __init__(self, dim, blocks, density=None):
        self.dim = dim
        self.bijectors = list(blocks)
        self.base_distribution = density  # only used by sample(); unused here
        self.log_det = None
        # Stack per-bijector parameters once so forward() is one pallas_call.
        self._w1 = jnp.stack([b.w1 for b in self.bijectors])              # (N, dh, H)
        self._b1 = jnp.stack([b.b1[None, :] for b in self.bijectors])     # (N, 1, H)
        self._w2s = jnp.stack([b.w2_s for b in self.bijectors])           # (N, H, dh)
        self._w2t = jnp.stack([b.w2_t for b in self.bijectors])           # (N, H, dh)
        self._b2s = jnp.stack([b.b2_s[None, :] for b in self.bijectors])  # (N, 1, dh)
        self._b2t = jnp.stack([b.b2_t[None, :] for b in self.bijectors])  # (N, 1, dh)
        self._swaps = tuple(bool(b.swap) for b in self.bijectors)

    def forward(self, z):
        z, ld = fused_coupling_flow(
            z, self._w1, self._b1, self._w2s, self._w2t,
            self._b2s, self._b2t, self._swaps)
        self.log_det = [ld[:, n] for n in range(len(self.bijectors))]
        return z, self.log_det

    def forward_reference(self, z):
        """Literal per-bijector chain (what the PyTorch forward() does)."""
        log_det = []
        for bijector in self.bijectors:
            if bijector.normalizing_direction:
                z, log_abs_det = bijector.inverse(z)
            else:
                z, log_abs_det = bijector.forward(z)
            log_det.append(log_abs_det)
        return z, log_det

    # TODO(synk): inverse()/sample() (generative direction) and base-density
    # log_prob are not exercised by the spec's forward(); not implemented.


# ----------------------------------------------------------------------------
if __name__ == "__main__":
    B, D, H, N_BLOCKS = 16, 8, 32, 4

    # deterministic example input
    x = jax.random.normal(jax.random.PRNGKey(0), (B, D), dtype=jnp.float32)

    # deterministic parameter init
    pkey = jax.random.PRNGKey(42)
    blocks = []
    for i in range(N_BLOCKS):
        pkey, sub = jax.random.split(pkey)
        blocks.append(AffineCouplingBijector(D, H, swap=bool(i % 2), key=sub))

    flow = NormalizingFlow(D, blocks)
    z, log_dets = flow.forward(x)

    z = jax.block_until_ready(z)
    for ld in log_dets:
        jax.block_until_ready(ld)

    assert z.shape == (B, D)
    assert len(log_dets) == N_BLOCKS and all(ld.shape == (B,) for ld in log_dets)

    # Validate the fused kernel against the literal per-bijector chain.
    # Tolerance documents the MXU default-precision matmul path vs the f32
    # (HIGHEST) reference; structural bugs produce O(0.1-1) errors and are
    # still caught.
    z_ref, log_dets_ref = flow.forward_reference(x)
    assert jnp.allclose(z, z_ref, rtol=5e-2, atol=5e-2)
    for a, b in zip(log_dets, log_dets_ref):
        assert jnp.allclose(a, b, rtol=5e-2, atol=5e-2)

    print("KERNEL_OK")
</pallas_src>

<mosaic_0001>
module attributes {stable_mosaic.version = 11 : i64} {
  func.func @kernel(%arg0: i32, %arg1: memref<16x8xf32, #tpu.memory_space<vmem>>, %arg2: memref<4x4x32xf32, #tpu.memory_space<vmem>>, %arg3: memref<4x1x32xf32, #tpu.memory_space<vmem>>, %arg4: memref<4x32x4xf32, #tpu.memory_space<vmem>>, %arg5: memref<4x32x4xf32, #tpu.memory_space<vmem>>, %arg6: memref<4x1x4xf32, #tpu.memory_space<vmem>>, %arg7: memref<4x1x4xf32, #tpu.memory_space<vmem>>, %arg8: memref<16x8xf32, #tpu.memory_space<vmem>>, %arg9: memref<16x4xf32, #tpu.memory_space<vmem>>) attributes {dimension_semantics = [#tpu.dimension_semantics<parallel>], iteration_bounds = array<i64: 1>, scalar_prefetch = 0 : i64, scratch_operands = 0 : i64, tpu.core_type = #tpu.core_type<tc>, window_params = [{transform_indices = @transform_0, window_bounds = array<i64: 16, 8>}, {pipeline_mode = #tpu.pipeline_mode<synchronous>, transform_indices = @transform_1, window_bounds = array<i64: 4, 4, 32>}, {pipeline_mode = #tpu.pipeline_mode<synchronous>, transform_indices = @transform_2, window_bounds = array<i64: 4, 1, 32>}, {pipeline_mode = #tpu.pipeline_mode<synchronous>, transform_indices = @transform_3, window_bounds = array<i64: 4, 32, 4>}, {pipeline_mode = #tpu.pipeline_mode<synchronous>, transform_indices = @transform_4, window_bounds = array<i64: 4, 32, 4>}, {pipeline_mode = #tpu.pipeline_mode<synchronous>, transform_indices = @transform_5, window_bounds = array<i64: 4, 1, 4>}, {pipeline_mode = #tpu.pipeline_mode<synchronous>, transform_indices = @transform_6, window_bounds = array<i64: 4, 1, 4>}, {transform_indices = @transform_7, window_bounds = array<i64: 16, 8>}, {transform_indices = @transform_8, window_bounds = array<i64: 16, 4>}]} {
    %c0 = arith.constant 0 : index
    %c0_0 = arith.constant 0 : index
    %0 = vector.load %arg1[%c0, %c0_0] : memref<16x8xf32, #tpu.memory_space<vmem>>, vector<16x8xf32>
    %1 = vector.extract_strided_slice %0 {offsets = [0, 0], sizes = [16, 4], strides = [1, 1]} : vector<16x8xf32> to vector<16x4xf32>
    %2 = vector.extract_strided_slice %0 {offsets = [0, 4], sizes = [16, 4], strides = [1, 1]} : vector<16x8xf32> to vector<16x4xf32>
    %c0_1 = arith.constant 0 : index
    %c0_2 = arith.constant 0 : index
    %c0_3 = arith.constant 0 : index
    %3 = vector.load %arg2[%c0_1, %c0_2, %c0_3] : memref<4x4x32xf32, #tpu.memory_space<vmem>>, vector<1x4x32xf32>
    %4 = vector.shape_cast %3 : vector<1x4x32xf32> to vector<4x32xf32>
    %cst = arith.constant dense<0.000000e+00> : vector<16x32xf32>
    %5 = tpu.matmul %1, %4, %cst {dimension_numbers = #tpu.dot_dimension_numbers<[1], [0], [0], [1], [0, 0, 1, 1], [], []>} : vector<16x4xf32>, vector<4x32xf32>, vector<16x32xf32> -> vector<16x32xf32>
    %c0_4 = arith.constant 0 : index
    %c0_5 = arith.constant 0 : index
    %c0_6 = arith.constant 0 : index
    %6 = vector.load %arg3[%c0_4, %c0_5, %c0_6] : memref<4x1x32xf32, #tpu.memory_space<vmem>>, vector<1x1x32xf32>
    %7 = vector.shape_cast %6 : vector<1x1x32xf32> to vector<1x32xf32>
    %8 = vector.broadcast %7 : vector<1x32xf32> to vector<16x32xf32>
    %9 = arith.addf %5, %8 : vector<16x32xf32>
    %10 = math.tanh %9 : vector<16x32xf32>
    %c0_7 = arith.constant 0 : index
    %c0_8 = arith.constant 0 : index
    %c0_9 = arith.constant 0 : index
    %11 = vector.load %arg4[%c0_7, %c0_8, %c0_9] : memref<4x32x4xf32, #tpu.memory_space<vmem>>, vector<1x32x4xf32>
    %12 = vector.shape_cast %11 : vector<1x32x4xf32> to vector<32x4xf32>
    %cst_10 = arith.constant dense<0.000000e+00> : vector<16x4xf32>
    %13 = tpu.matmul %10, %12, %cst_10 {dimension_numbers = #tpu.dot_dimension_numbers<[1], [0], [0], [1], [0, 0, 1, 1], [], []>} : vector<16x32xf32>, vector<32x4xf32>, vector<16x4xf32> -> vector<16x4xf32>
    %c0_11 = arith.constant 0 : index
    %c0_12 = arith.constant 0 : index
    %c0_13 = arith.constant 0 : index
    %14 = vector.load %arg6[%c0_11, %c0_12, %c0_13] : memref<4x1x4xf32, #tpu.memory_space<vmem>>, vector<1x1x4xf32>
    %15 = vector.shape_cast %14 : vector<1x1x4xf32> to vector<1x4xf32>
    %16 = vector.broadcast %15 : vector<1x4xf32> to vector<16x4xf32>
    %17 = arith.addf %13, %16 : vector<16x4xf32>
    %18 = math.tanh %17 : vector<16x4xf32>
    %c0_14 = arith.constant 0 : index
    %c0_15 = arith.constant 0 : index
    %c0_16 = arith.constant 0 : index
    %19 = vector.load %arg5[%c0_14, %c0_15, %c0_16] : memref<4x32x4xf32, #tpu.memory_space<vmem>>, vector<1x32x4xf32>
    %20 = vector.shape_cast %19 : vector<1x32x4xf32> to vector<32x4xf32>
    %cst_17 = arith.constant dense<0.000000e+00> : vector<16x4xf32>
    %21 = tpu.matmul %10, %20, %cst_17 {dimension_numbers = #tpu.dot_dimension_numbers<[1], [0], [0], [1], [0, 0, 1, 1], [], []>} : vector<16x32xf32>, vector<32x4xf32>, vector<16x4xf32> -> vector<16x4xf32>
    %c0_18 = arith.constant 0 : index
    %c0_19 = arith.constant 0 : index
    %c0_20 = arith.constant 0 : index
    %22 = vector.load %arg7[%c0_18, %c0_19, %c0_20] : memref<4x1x4xf32, #tpu.memory_space<vmem>>, vector<1x1x4xf32>
    %23 = vector.shape_cast %22 : vector<1x1x4xf32> to vector<1x4xf32>
    %24 = vector.broadcast %23 : vector<1x4xf32> to vector<16x4xf32>
    %25 = arith.addf %21, %24 : vector<16x4xf32>
    %26 = arith.subf %2, %25 : vector<16x4xf32>
    %cst_21 = arith.constant 0.000000e+00 : f32
    %27 = vector.broadcast %cst_21 : f32 to vector<16x4xf32>
    %28 = arith.subf %27, %18 : vector<16x4xf32>
    %29 = math.exp %28 : vector<16x4xf32>
    %30 = arith.mulf %26, %29 : vector<16x4xf32>
    %cst_22 = arith.constant dense<0.000000e+00> : vector<16xf32>
    %31 = vector.multi_reduction <add>, %18, %cst_22 [1] : vector<16x4xf32> to vector<16xf32>
    %32 = vector.shape_cast %31 : vector<16xf32> to vector<16x1xf32>
    %cst_23 = arith.constant 0.000000e+00 : f32
    %33 = vector.broadcast %cst_23 : f32 to vector<16x1xf32>
    %34 = arith.subf %33, %32 : vector<16x1xf32>
    %c1 = arith.constant 1 : index
    %c0_24 = arith.constant 0 : index
    %c0_25 = arith.constant 0 : index
    %35 = vector.load %arg2[%c1, %c0_24, %c0_25] : memref<4x4x32xf32, #tpu.memory_space<vmem>>, vector<1x4x32xf32>
    %36 = vector.shape_cast %35 : vector<1x4x32xf32> to vector<4x32xf32>
    %cst_26 = arith.constant dense<0.000000e+00> : vector<16x32xf32>
    %37 = tpu.matmul %30, %36, %cst_26 {dimension_numbers = #tpu.dot_dimension_numbers<[1], [0], [0], [1], [0, 0, 1, 1], [], []>} : vector<16x4xf32>, vector<4x32xf32>, vector<16x32xf32> -> vector<16x32xf32>
    %c1_27 = arith.constant 1 : index
    %c0_28 = arith.constant 0 : index
    %c0_29 = arith.constant 0 : index
    %38 = vector.load %arg3[%c1_27, %c0_28, %c0_29] : memref<4x1x32xf32, #tpu.memory_space<vmem>>, vector<1x1x32xf32>
    %39 = vector.shape_cast %38 : vector<1x1x32xf32> to vector<1x32xf32>
    %40 = vector.broadcast %39 : vector<1x32xf32> to vector<16x32xf32>
    %41 = arith.addf %37, %40 : vector<16x32xf32>
    %42 = math.tanh %41 : vector<16x32xf32>
    %c1_30 = arith.constant 1 : index
    %c0_31 = arith.constant 0 : index
    %c0_32 = arith.constant 0 : index
    %43 = vector.load %arg4[%c1_30, %c0_31, %c0_32] : memref<4x32x4xf32, #tpu.memory_space<vmem>>, vector<1x32x4xf32>
    %44 = vector.shape_cast %43 : vector<1x32x4xf32> to vector<32x4xf32>
    %cst_33 = arith.constant dense<0.000000e+00> : vector<16x4xf32>
    %45 = tpu.matmul %42, %44, %cst_33 {dimension_numbers = #tpu.dot_dimension_numbers<[1], [0], [0], [1], [0, 0, 1, 1], [], []>} : vector<16x32xf32>, vector<32x4xf32>, vector<16x4xf32> -> vector<16x4xf32>
    %c1_34 = arith.constant 1 : index
    %c0_35 = arith.constant 0 : index
    %c0_36 = arith.constant 0 : index
    %46 = vector.load %arg6[%c1_34, %c0_35, %c0_36] : memref<4x1x4xf32, #tpu.memory_space<vmem>>, vector<1x1x4xf32>
    %47 = vector.shape_cast %46 : vector<1x1x4xf32> to vector<1x4xf32>
    %48 = vector.broadcast %47 : vector<1x4xf32> to vector<16x4xf32>
    %49 = arith.addf %45, %48 : vector<16x4xf32>
    %50 = math.tanh %49 : vector<16x4xf32>
    %c1_37 = arith.constant 1 : index
    %c0_38 = arith.constant 0 : index
    %c0_39 = arith.constant 0 : index
    %51 = vector.load %arg5[%c1_37, %c0_38, %c0_39] : memref<4x32x4xf32, #tpu.memory_space<vmem>>, vector<1x32x4xf32>
    %52 = vector.shape_cast %51 : vector<1x32x4xf32> to vector<32x4xf32>
    %cst_40 = arith.constant dense<0.000000e+00> : vector<16x4xf32>
    %53 = tpu.matmul %42, %52, %cst_40 {dimension_numbers = #tpu.dot_dimension_numbers<[1], [0], [0], [1], [0, 0, 1, 1], [], []>} : vector<16x32xf32>, vector<32x4xf32>, vector<16x4xf32> -> vector<16x4xf32>
    %c1_41 = arith.constant 1 : index
    %c0_42 = arith.constant 0 : index
    %c0_43 = arith.constant 0 : index
    %54 = vector.load %arg7[%c1_41, %c0_42, %c0_43] : memref<4x1x4xf32, #tpu.memory_space<vmem>>, vector<1x1x4xf32>
    %55 = vector.shape_cast %54 : vector<1x1x4xf32> to vector<1x4xf32>
    %56 = vector.broadcast %55 : vector<1x4xf32> to vector<16x4xf32>
    %57 = arith.addf %53, %56 : vector<16x4xf32>
    %58 = arith.subf %1, %57 : vector<16x4xf32>
    %cst_44 = arith.constant 0.000000e+00 : f32
    %59 = vector.broadcast %cst_44 : f32 to vector<16x4xf32>
    %60 = arith.subf %59, %50 : vector<16x4xf32>
    %61 = math.exp %60 : vector<16x4xf32>
    %62 = arith.mulf %58, %61 : vector<16x4xf32>
    %cst_45 = arith.constant dense<0.000000e+00> : vector<16xf32>
    %63 = vector.multi_reduction <add>, %50, %cst_45 [1] : vector<16x4xf32> to vector<16xf32>
    %64 = vector.shape_cast %63 : vector<16xf32> to vector<16x1xf32>
    %cst_46 = arith.constant 0.000000e+00 : f32
    %65 = vector.broadcast %cst_46 : f32 to vector<16x1xf32>
    %66 = arith.subf %65, %64 : vector<16x1xf32>
    %c2 = arith.constant 2 : index
    %c0_47 = arith.constant 0 : index
    %c0_48 = arith.constant 0 : index
    %67 = vector.load %arg2[%c2, %c0_47, %c0_48] : memref<4x4x32xf32, #tpu.memory_space<vmem>>, vector<1x4x32xf32>
    %68 = vector.shape_cast %67 : vector<1x4x32xf32> to vector<4x32xf32>
    %cst_49 = arith.constant dense<0.000000e+00> : vector<16x32xf32>
    %69 = tpu.matmul %62, %68, %cst_49 {dimension_numbers = #tpu.dot_dimension_numbers<[1], [0], [0], [1], [0, 0, 1, 1], [], []>} : vector<16x4xf32>, vector<4x32xf32>, vector<16x32xf32> -> vector<16x32xf32>
    %c2_50 = arith.constant 2 : index
    %c0_51 = arith.constant 0 : index
    %c0_52 = arith.constant 0 : index
    %70 = vector.load %arg3[%c2_50, %c0_51, %c0_52] : memref<4x1x32xf32, #tpu.memory_space<vmem>>, vector<1x1x32xf32>
    %71 = vector.shape_cast %70 : vector<1x1x32xf32> to vector<1x32xf32>
    %72 = vector.broadcast %71 : vector<1x32xf32> to vector<16x32xf32>
    %73 = arith.addf %69, %72 : vector<16x32xf32>
    %74 = math.tanh %73 : vector<16x32xf32>
    %c2_53 = arith.constant 2 : index
    %c0_54 = arith.constant 0 : index
    %c0_55 = arith.constant 0 : index
    %75 = vector.load %arg4[%c2_53, %c0_54, %c0_55] : memref<4x32x4xf32, #tpu.memory_space<vmem>>, vector<1x32x4xf32>
    %76 = vector.shape_cast %75 : vector<1x32x4xf32> to vector<32x4xf32>
    %cst_56 = arith.constant dense<0.000000e+00> : vector<16x4xf32>
    %77 = tpu.matmul %74, %76, %cst_56 {dimension_numbers = #tpu.dot_dimension_numbers<[1], [0], [0], [1], [0, 0, 1, 1], [], []>} : vector<16x32xf32>, vector<32x4xf32>, vector<16x4xf32> -> vector<16x4xf32>
    %c2_57 = arith.constant 2 : index
    %c0_58 = arith.constant 0 : index
    %c0_59 = arith.constant 0 : index
    %78 = vector.load %arg6[%c2_57, %c0_58, %c0_59] : memref<4x1x4xf32, #tpu.memory_space<vmem>>, vector<1x1x4xf32>
    %79 = vector.shape_cast %78 : vector<1x1x4xf32> to vector<1x4xf32>
    %80 = vector.broadcast %79 : vector<1x4xf32> to vector<16x4xf32>
    %81 = arith.addf %77, %80 : vector<16x4xf32>
    %82 = math.tanh %81 : vector<16x4xf32>
    %c2_60 = arith.constant 2 : index
    %c0_61 = arith.constant 0 : index
    %c0_62 = arith.constant 0 : index
    %83 = vector.load %arg5[%c2_60, %c0_61, %c0_62] : memref<4x32x4xf32, #tpu.memory_space<vmem>>, vector<1x32x4xf32>
    %84 = vector.shape_cast %83 : vector<1x32x4xf32> to vector<32x4xf32>
    %cst_63 = arith.constant dense<0.000000e+00> : vector<16x4xf32>
    %85 = tpu.matmul %74, %84, %cst_63 {dimension_numbers = #tpu.dot_dimension_numbers<[1], [0], [0], [1], [0, 0, 1, 1], [], []>} : vector<16x32xf32>, vector<32x4xf32>, vector<16x4xf32> -> vector<16x4xf32>
    %c2_64 = arith.constant 2 : index
    %c0_65 = arith.constant 0 : index
    %c0_66 = arith.constant 0 : index
    %86 = vector.load %arg7[%c2_64, %c0_65, %c0_66] : memref<4x1x4xf32, #tpu.memory_space<vmem>>, vector<1x1x4xf32>
    %87 = vector.shape_cast %86 : vector<1x1x4xf32> to vector<1x4xf32>
    %88 = vector.broadcast %87 : vector<1x4xf32> to vector<16x4xf32>
    %89 = arith.addf %85, %88 : vector<16x4xf32>
    %90 = arith.subf %30, %89 : vector<16x4xf32>
    %cst_67 = arith.constant 0.000000e+00 : f32
    %91 = vector.broadcast %cst_67 : f32 to vector<16x4xf32>
    %92 = arith.subf %91, %82 : vector<16x4xf32>
    %93 = math.exp %92 : vector<16x4xf32>
    %94 = arith.mulf %90, %93 : vector<16x4xf32>
    %cst_68 = arith.constant dense<0.000000e+00> : vector<16xf32>
    %95 = vector.multi_reduction <add>, %82, %cst_68 [1] : vector<16x4xf32> to vector<16xf32>
    %96 = vector.shape_cast %95 : vector<16xf32> to vector<16x1xf32>
    %cst_69 = arith.constant 0.000000e+00 : f32
    %97 = vector.broadcast %cst_69 : f32 to vector<16x1xf32>
    %98 = arith.subf %97, %96 : vector<16x1xf32>
    %c3 = arith.constant 3 : index
    %c0_70 = arith.constant 0 : index
    %c0_71 = arith.constant 0 : index
    %99 = vector.load %arg2[%c3, %c0_70, %c0_71] : memref<4x4x32xf32, #tpu.memory_space<vmem>>, vector<1x4x32xf32>
    %100 = vector.shape_cast %99 : vector<1x4x32xf32> to vector<4x32xf32>
    %cst_72 = arith.constant dense<0.000000e+00> : vector<16x32xf32>
    %101 = tpu.matmul %94, %100, %cst_72 {dimension_numbers = #tpu.dot_dimension_numbers<[1], [0], [0], [1], [0, 0, 1, 1], [], []>} : vector<16x4xf32>, vector<4x32xf32>, vector<16x32xf32> -> vector<16x32xf32>
    %c3_73 = arith.constant 3 : index
    %c0_74 = arith.constant 0 : index
    %c0_75 = arith.constant 0 : index
    %102 = vector.load %arg3[%c3_73, %c0_74, %c0_75] : memref<4x1x32xf32, #tpu.memory_space<vmem>>, vector<1x1x32xf32>
    %103 = vector.shape_cast %102 : vector<1x1x32xf32> to vector<1x32xf32>
    %104 = vector.broadcast %103 : vector<1x32xf32> to vector<16x32xf32>
    %105 = arith.addf %101, %104 : vector<16x32xf32>
    %106 = math.tanh %105 : vector<16x32xf32>
    %c3_76 = arith.constant 3 : index
    %c0_77 = arith.constant 0 : index
    %c0_78 = arith.constant 0 : index
    %107 = vector.load %arg4[%c3_76, %c0_77, %c0_78] : memref<4x32x4xf32, #tpu.memory_space<vmem>>, vector<1x32x4xf32>
    %108 = vector.shape_cast %107 : vector<1x32x4xf32> to vector<32x4xf32>
    %cst_79 = arith.constant dense<0.000000e+00> : vector<16x4xf32>
    %109 = tpu.matmul %106, %108, %cst_79 {dimension_numbers = #tpu.dot_dimension_numbers<[1], [0], [0], [1], [0, 0, 1, 1], [], []>} : vector<16x32xf32>, vector<32x4xf32>, vector<16x4xf32> -> vector<16x4xf32>
    %c3_80 = arith.constant 3 : index
    %c0_81 = arith.constant 0 : index
    %c0_82 = arith.constant 0 : index
    %110 = vector.load %arg6[%c3_80, %c0_81, %c0_82] : memref<4x1x4xf32, #tpu.memory_space<vmem>>, vector<1x1x4xf32>
    %111 = vector.shape_cast %110 : vector<1x1x4xf32> to vector<1x4xf32>
    %112 = vector.broadcast %111 : vector<1x4xf32> to vector<16x4xf32>
    %113 = arith.addf %109, %112 : vector<16x4xf32>
    %114 = math.tanh %113 : vector<16x4xf32>
    %c3_83 = arith.constant 3 : index
    %c0_84 = arith.constant 0 : index
    %c0_85 = arith.constant 0 : index
    %115 = vector.load %arg5[%c3_83, %c0_84, %c0_85] : memref<4x32x4xf32, #tpu.memory_space<vmem>>, vector<1x32x4xf32>
    %116 = vector.shape_cast %115 : vector<1x32x4xf32> to vector<32x4xf32>
    %cst_86 = arith.constant dense<0.000000e+00> : vector<16x4xf32>
    %117 = tpu.matmul %106, %116, %cst_86 {dimension_numbers = #tpu.dot_dimension_numbers<[1], [0], [0], [1], [0, 0, 1, 1], [], []>} : vector<16x32xf32>, vector<32x4xf32>, vector<16x4xf32> -> vector<16x4xf32>
    %c3_87 = arith.constant 3 : index
    %c0_88 = arith.constant 0 : index
    %c0_89 = arith.constant 0 : index
    %118 = vector.load %arg7[%c3_87, %c0_88, %c0_89] : memref<4x1x4xf32, #tpu.memory_space<vmem>>, vector<1x1x4xf32>
    %119 = vector.shape_cast %118 : vector<1x1x4xf32> to vector<1x4xf32>
    %120 = vector.broadcast %119 : vector<1x4xf32> to vector<16x4xf32>
    %121 = arith.addf %117, %120 : vector<16x4xf32>
    %122 = arith.subf %62, %121 : vector<16x4xf32>
    %cst_90 = arith.constant 0.000000e+00 : f32
    %123 = vector.broadcast %cst_90 : f32 to vector<16x4xf32>
    %124 = arith.subf %123, %114 : vector<16x4xf32>
    %125 = math.exp %124 : vector<16x4xf32>
    %126 = arith.mulf %122, %125 : vector<16x4xf32>
    %cst_91 = arith.constant dense<0.000000e+00> : vector<16xf32>
    %127 = vector.multi_reduction <add>, %114, %cst_91 [1] : vector<16x4xf32> to vector<16xf32>
    %128 = vector.shape_cast %127 : vector<16xf32> to vector<16x1xf32>
    %cst_92 = arith.constant 0.000000e+00 : f32
    %129 = vector.broadcast %cst_92 : f32 to vector<16x1xf32>
    %130 = arith.subf %129, %128 : vector<16x1xf32>
    %c0_93 = arith.constant 0 : index
    %c0_94 = arith.constant 0 : index
    %131 = vector.load %arg8[%c0_93, %c0_94] : memref<16x8xf32, #tpu.memory_space<vmem>>, vector<16x4xf32>
    tpu.vector_store %arg8[%c0_93, %c0_94], %126 {strides = array<i32>} : memref<16x8xf32, #tpu.memory_space<vmem>>, vector<16x4xf32>,
    %c0_95 = arith.constant 0 : index
    %c4 = arith.constant 4 : index
    %132 = vector.load %arg8[%c0_95, %c4] : memref<16x8xf32, #tpu.memory_space<vmem>>, vector<16x4xf32>
    tpu.vector_store %arg8[%c0_95, %c4], %94 {strides = array<i32>} : memref<16x8xf32, #tpu.memory_space<vmem>>, vector<16x4xf32>,
    %133 = tpu.iota {dimensions = array<i32: 1>} : vector<16x4xi32>
    %cst_96 = arith.constant 0.000000e+00 : f32
    %134 = vector.broadcast %cst_96 : f32 to vector<16x4xf32>
    %c0_i32 = arith.constant 0 : i32
    %135 = vector.broadcast %c0_i32 : i32 to vector<16x4xi32>
    %136 = arith.cmpi eq, %133, %135 : vector<16x4xi32>
    %137 = vector.shape_cast %34 : vector<16x1xf32> to vector<16x1xf32>
    %138 = vector.broadcast %137 : vector<16x1xf32> to vector<16x4xf32>
    %139 = arith.select %136, %138, %134 : vector<16x4xi1>, vector<16x4xf32>
    %c1_i32 = arith.constant 1 : i32
    %140 = vector.broadcast %c1_i32 : i32 to vector<16x4xi32>
    %141 = arith.cmpi eq, %133, %140 : vector<16x4xi32>
    %142 = vector.shape_cast %66 : vector<16x1xf32> to vector<16x1xf32>
    %143 = vector.broadcast %142 : vector<16x1xf32> to vector<16x4xf32>
    %144 = arith.select %141, %143, %139 : vector<16x4xi1>, vector<16x4xf32>
    %c2_i32 = arith.constant 2 : i32
    %145 = vector.broadcast %c2_i32 : i32 to vector<16x4xi32>
    %146 = arith.cmpi eq, %133, %145 : vector<16x4xi32>
    %147 = vector.shape_cast %98 : vector<16x1xf32> to vector<16x1xf32>
    %148 = vector.broadcast %147 : vector<16x1xf32> to vector<16x4xf32>
    %149 = arith.select %146, %148, %144 : vector<16x4xi1>, vector<16x4xf32>
    %c3_i32 = arith.constant 3 : i32
    %150 = vector.broadcast %c3_i32 : i32 to vector<16x4xi32>
    %151 = arith.cmpi eq, %133, %150 : vector<16x4xi32>
    %152 = vector.shape_cast %130 : vector<16x1xf32> to vector<16x1xf32>
    %153 = vector.broadcast %152 : vector<16x1xf32> to vector<16x4xf32>
    %154 = arith.select %151, %153, %149 : vector<16x4xi1>, vector<16x4xf32>
    %c0_97 = arith.constant 0 : index
    %c0_98 = arith.constant 0 : index
    %155 = vector.load %arg9[%c0_97, %c0_98] : memref<16x4xf32, #tpu.memory_space<vmem>>, vector<16x4xf32>
    tpu.vector_store %arg9[%c0_97, %c0_98], %154 {strides = array<i32>} : memref<16x4xf32, #tpu.memory_space<vmem>>, vector<16x4xf32>,
    return
  }
  func.func @transform_0(%arg0: i32) -> (i32, i32) {
    %c0_i32 = arith.constant 0 : i32
    %c0_i32_0 = arith.constant 0 : i32
    return %arg0, %c0_i32 : i32, i32
  }
  func.func @transform_1(%arg0: i32) -> (i32, i32, i32) {
    %c0_i32 = arith.constant 0 : i32
    %c0_i32_0 = arith.constant 0 : i32
    %c0_i32_1 = arith.constant 0 : i32
    %c0_i32_2 = arith.constant 0 : i32
    return %c0_i32, %c0_i32_0, %c0_i32_1 : i32, i32, i32
  }
  func.func @transform_2(%arg0: i32) -> (i32, i32, i32) {
    %c0_i32 = arith.constant 0 : i32
    %c0_i32_0 = arith.constant 0 : i32
    %c0_i32_1 = arith.constant 0 : i32
    %c0_i32_2 = arith.constant 0 : i32
    return %c0_i32, %c0_i32_0, %c0_i32_1 : i32, i32, i32
  }
  func.func @transform_3(%arg0: i32) -> (i32, i32, i32) {
    %c0_i32 = arith.constant 0 : i32
    %c0_i32_0 = arith.constant 0 : i32
    %c0_i32_1 = arith.constant 0 : i32
    %c0_i32_2 = arith.constant 0 : i32
    return %c0_i32, %c0_i32_0, %c0_i32_1 : i32, i32, i32
  }
  func.func @transform_4(%arg0: i32) -> (i32, i32, i32) {
    %c0_i32 = arith.constant 0 : i32
    %c0_i32_0 = arith.constant 0 : i32
    %c0_i32_1 = arith.constant 0 : i32
    %c0_i32_2 = arith.constant 0 : i32
    return %c0_i32, %c0_i32_0, %c0_i32_1 : i32, i32, i32
  }
  func.func @transform_5(%arg0: i32) -> (i32, i32, i32) {
    %c0_i32 = arith.constant 0 : i32
    %c0_i32_0 = arith.constant 0 : i32
    %c0_i32_1 = arith.constant 0 : i32
    %c0_i32_2 = arith.constant 0 : i32
    return %c0_i32, %c0_i32_0, %c0_i32_1 : i32, i32, i32
  }
  func.func @transform_6(%arg0: i32) -> (i32, i32, i32) {
    %c0_i32 = arith.constant 0 : i32
    %c0_i32_0 = arith.constant 0 : i32
    %c0_i32_1 = arith.constant 0 : i32
    %c0_i32_2 = arith.constant 0 : i32
    return %c0_i32, %c0_i32_0, %c0_i32_1 : i32, i32, i32
  }
  func.func @transform_7(%arg0: i32) -> (i32, i32) {
    %c0_i32 = arith.constant 0 : i32
    %c0_i32_0 = arith.constant 0 : i32
    return %arg0, %c0_i32 : i32, i32
  }
  func.func @transform_8(%arg0: i32) -> (i32, i32) {
    %c0_i32 = arith.constant 0 : i32
    %c0_i32_0 = arith.constant 0 : i32
    return %arg0, %c0_i32 : i32, i32
  }
}

</mosaic_0001>

<llo_original>
// kernel: tpu_custom_call.1
$region0: #{tpu_custom_call.1}
  #allocation0 [shape = 'u32[]', space=smem, size = 0x4, offset = 0x4, fixed_abs, tag = 'smem constant byte address 0x4 - core index']
  #allocation1 [shape = 'u32[144,128]{1,0:T(1,128)}', space=vmem, size = 0x12000, scoped, tag = 'internal scratch']
  %s0 = inlined_call_operand.vmem [shape: f32[16,8], index: 0, kind: input, shape index: {}]
  %s1 = inlined_call_operand.vmem [shape: f32[4,4,32], index: 1, kind: input, shape index: {}]
  %s2 = inlined_call_operand.vmem [shape: f32[4,1,32], index: 2, kind: input, shape index: {}]
  %s3 = inlined_call_operand.vmem [shape: f32[4,32,4], index: 3, kind: input, shape index: {}]
  %s4 = inlined_call_operand.vmem [shape: f32[4,32,4], index: 4, kind: input, shape index: {}]
  %s5 = inlined_call_operand.vmem [shape: f32[4,1,4], index: 5, kind: input, shape index: {}]
  %s6 = inlined_call_operand.vmem [shape: f32[4,1,4], index: 6, kind: input, shape index: {}]
  %s7 = inlined_call_operand.vmem [shape: f32[16,8], index: 7, kind: output, shape index: {0}]
  %s8 = inlined_call_operand.vmem [shape: f32[16,4], index: 8, kind: output, shape index: {1}]
  %9 = xla_tuple %s7, %s8
  %s10 = sld [smem:[#allocation0]]
  $region46: #{tpu_custom_call.1} parent=0
    _
  %s12 = ssub.s32 1, %s10
  %s13 = scalar_select 0, %s12, %s10
  // Predicated region
  $region2: #{tpu_custom_call.1} parent=0 // pred_check
    _
  $region3: #{tpu_custom_call.1} parent=0 // pred_check_branch
    %15 = sbr.rel (0) target = $region5
  $region4: #{tpu_custom_call.1} parent=0 // pred_region
    _
  $region5: #{tpu_custom_call.1} parent=0 // pred_fallthru
    _
  // Predicated region
  $region6: #{tpu_custom_call.1} parent=0 // pred_check
    _
  $region7: #{tpu_custom_call.1} parent=0 // pred_check_branch
    %17 = sbr.rel (0) target = $region9
  $region8: #{tpu_custom_call.1} parent=0 // pred_region
    _
  $region9: #{tpu_custom_call.1} parent=0 // pred_fallthru
    _
  // Predicated region
  $region10: #{tpu_custom_call.1} parent=0 // pred_check
    _
  $region11: #{tpu_custom_call.1} parent=0 // pred_check_branch
    %19 = sbr.rel (0) target = $region13
  $region12: #{tpu_custom_call.1} parent=0 // pred_region
    _
  $region13: #{tpu_custom_call.1} parent=0 // pred_fallthru
    _
  // Predicated region
  $region14: #{tpu_custom_call.1} parent=0 // pred_check
    _
  $region15: #{tpu_custom_call.1} parent=0 // pred_check_branch
    %21 = sbr.rel (0) target = $region17
  $region16: #{tpu_custom_call.1} parent=0 // pred_region
    _
  $region17: #{tpu_custom_call.1} parent=0 // pred_fallthru
    _
  // Predicated region
  $region18: #{tpu_custom_call.1} parent=0 // pred_check
    _
  $region19: #{tpu_custom_call.1} parent=0 // pred_check_branch
    %23 = sbr.rel (0) target = $region21
  $region20: #{tpu_custom_call.1} parent=0 // pred_region
    _
  $region21: #{tpu_custom_call.1} parent=0 // pred_fallthru
    _
  // Predicated region
  $region22: #{tpu_custom_call.1} parent=0 // pred_check
    _
  $region23: #{tpu_custom_call.1} parent=0 // pred_check_branch
    %25 = sbr.rel (0) target = $region25
  $region24: #{tpu_custom_call.1} parent=0 // pred_region
    _
  $region25: #{tpu_custom_call.1} parent=0 // pred_fallthru
    _
  // Predicated region
  $region26: #{tpu_custom_call.1} parent=0 // pred_check
    _
  $region27: #{tpu_custom_call.1} parent=0 // pred_check_branch
    %27 = sbr.rel (0) target = $region29
  $region28: #{tpu_custom_call.1} parent=0 // pred_region
    _
  $region29: #{tpu_custom_call.1} parent=0 // pred_fallthru
    _
  %v28 = vld [vmem:[%s0] sm:$0xff]
  %v29 = vld [vmem:[%s0 + $0x8] sm:$0xff]
  %v30 = vld [vmem:[%s1] sm:$0xf]
  %v31 = vld [vmem:[%s2] sm:$0x1]
  %v33 = vlaneseq
  %v34 = vshrl.u32 %v33, 7
  %v35 = vsub.s32 0, %v34
  %v36 = vrot.slane %v31, %v35
  %vm38 = vcmask 31744
  %v40 = vsel %vm38, %v28, 0
  %v43 = vsel %vm38, %v29, 0
  %vm45 = vcmask 1043456
  %v47 = vsel %vm45, %v30, 0
  %49 = vmatprep.subr.mxu0 0.0
  %50 = vmatpush1.msra.mxu0 0.0
  %51 = vmatprep.subr.mxu0 0.0
  %52 = vmatpush1.msra.mxu0 0.0
  %53 = vmatprep.subr.mxu0 0.0
  %54 = vmatpush1.msra.mxu0 0.0
  %55 = vmatprep.subr.mxu0 0.0
  %56 = vmatpush1.msra.mxu0 0.0
  %57 = vmatprep.subr.mxu0 0.0
  %58 = vmatpush1.msra.mxu0 0.0
  %59 = vmatprep.subr.mxu0 0.0
  %60 = vmatpush1.msra.mxu0 0.0
  %61 = vmatprep.subr.mxu0 0.0
  %62 = vmatpush1.msra.mxu0 0.0
  %63 = vmatprep.subr.mxu0 0.0
  %64 = vmatpush1.msra.mxu0 0.0
  %65 = vmatprep.subr.mxu0 0.0
  %66 = vmatpush1.msra.mxu0 0.0
  %67 = vmatprep.subr.mxu0 0.0
  %68 = vmatpush1.msra.mxu0 0.0
  %69 = vmatprep.subr.mxu0 0.0
  %70 = vmatpush1.msra.mxu0 0.0
  %71 = vmatprep.subr.mxu0 0.0
  %72 = vmatpush1.msra.mxu0 0.0
  %73 = vmatprep.subr.mxu0 0.0
  %74 = vmatpush1.msra.mxu0 0.0
  %75 = vmatprep.subr.mxu0 0.0
  %76 = vmatpush1.msra.mxu0 0.0
  %77 = vmatprep.subr.mxu0 0.0
  %78 = vmatpush1.msra.mxu0 0.0
  %79 = vmatprep.subr.mxu0 0.0
  %80 = vmatpush1.msra.mxu0 %v47
  %81 = vmatprep.subr.mxu0 0.0
  %82 = vmatpush2.msra.mxu0 0.0
  %83 = vmatprep.subr.mxu0 0.0
  %84 = vmatpush2.msra.mxu0 0.0
  %85 = vmatprep.subr.mxu0 0.0
  %86 = vmatpush2.msra.mxu0 0.0
  %87 = vmatprep.subr.mxu0 0.0
  %88 = vmatpush2.msra.mxu0 0.0
  %89 = vmatprep.subr.mxu0 0.0
  %90 = vmatpush2.msra.mxu0 0.0
  %91 = vmatprep.subr.mxu0 0.0
  %92 = vmatpush2.msra.mxu0 0.0
  %93 = vmatprep.subr.mxu0 0.0
  %94 = vmatpush2.msra.mxu0 0.0
  %95 = vmatprep.subr.mxu0 0.0
  %96 = vmatpush2.msra.mxu0 0.0
  %97 = vmatprep.subr.mxu0 0.0
  %98 = vmatpush2.msra.mxu0 0.0
  %99 = vmatprep.subr.mxu0 0.0
  %100 = vmatpush2.msra.mxu0 0.0
  %101 = vmatprep.subr.mxu0 0.0
  %102 = vmatpush2.msra.mxu0 0.0
  %103 = vmatprep.subr.mxu0 0.0
  %104 = vmatpush2.msra.mxu0 0.0
  %105 = vmatprep.subr.mxu0 0.0
  %106 = vmatpush2.msra.mxu0 0.0
  %107 = vmatprep.subr.mxu0 0.0
  %108 = vmatpush2.msra.mxu0 0.0
  %109 = vmatprep.subr.mxu0 0.0
  %110 = vmatpush2.msra.mxu0 0.0
  %111 = vmatprep.subr.mxu0 0.0
  %112 = vmatpush2.msra.mxu0 0.0
  %113 = vmatprep.mubr.f32.mxu0 0.0
  %114 = vmatmul.mubr.f32.gmra.mxu0 %v40
  %v115 = vpop.f32.mrf.mxu0
  %v116 = vadd.f32 %v36, %v115
  %v117 = vpop.f32.mrf.mxu0
  %118 = vmatprep.mubr.f32.mxu0 0.0
  %119 = vmatmul.mubr.f32.gmra.mxu0 %v43
  %v120 = vpop.f32.mrf.mxu0
  %v121 = vadd.f32 %v36, %v120
  %v122 = vpop.f32.mrf.mxu0
  %123 = vdwg.mxu0
  %v124 = vtanh.pop %v116
  %v125 = vtanh.pop %v121
  %v126 = vld [vmem:[%s3] sm:$0xff]
  %v127 = vld [vmem:[%s3 + $0x8] sm:$0xff]
  %v128 = vld [vmem:[%s3 + $0x10] sm:$0xff]
  %v129 = vld [vmem:[%s3 + $0x18] sm:$0xff]
  %v130 = vld [vmem:[%s5] sm:$0x1]
  %v132 = vlaneseq
  %v133 = vshrl.u32 %v132, 7
  %v134 = vsub.s32 0, %v133
  %v135 = vrot.slane %v130, %v134
  %vm137 = vcmask 261120
  %v139 = vsel %vm137, %v124, 0
  %v142 = vsel %vm137, %v125, 0
  %144 = vmatprep.subr.mxu0 0.0
  %145 = vmatpush1.msra.mxu0 0.0
  %146 = vmatprep.subr.mxu0 0.0
  %147 = vmatpush1.msra.mxu0 0.0
  %148 = vmatprep.subr.mxu0 0.0
  %149 = vmatpush1.msra.mxu0 0.0
  %150 = vmatprep.subr.mxu0 0.0
  %151 = vmatpush1.msra.mxu0 0.0
  %152 = vmatprep.subr.mxu0 0.0
  %153 = vmatpush1.msra.mxu0 0.0
  %154 = vmatprep.subr.mxu0 0.0
  %155 = vmatpush1.msra.mxu0 0.0
  %156 = vmatprep.subr.mxu0 0.0
  %157 = vmatpush1.msra.mxu0 0.0
  %158 = vmatprep.subr.mxu0 0.0
  %159 = vmatpush1.msra.mxu0 0.0
  %160 = vmatprep.subr.mxu0 0.0
  %161 = vmatpush1.msra.mxu0 0.0
  %162 = vmatprep.subr.mxu0 0.0
  %163 = vmatpush1.msra.mxu0 0.0
  %164 = vmatprep.subr.mxu0 0.0
  %165 = vmatpush1.msra.mxu0 0.0
  %166 = vmatprep.subr.mxu0 0.0
  %167 = vmatpush1.msra.mxu0 0.0
  %168 = vmatprep.subr.mxu0 0.0
  %169 = vmatpush1.msra.mxu0 %v129
  %170 = vmatprep.subr.mxu0 0.0
  %171 = vmatpush1.msra.mxu0 %v128
  %172 = vmatprep.subr.mxu0 0.0
  %173 = vmatpush1.msra.mxu0 %v127
  %174 = vmatprep.subr.mxu0 0.0
  %175 = vmatpush1.msra.mxu0 %v126
  %176 = vmatprep.subr.mxu0 0.0
  %177 = vmatpush2.msra.mxu0 0.0
  %178 = vmatprep.subr.mxu0 0.0
  %179 = vmatpush2.msra.mxu0 0.0
  %180 = vmatprep.subr.mxu0 0.0
  %181 = vmatpush2.msra.mxu0 0.0
  %182 = vmatprep.subr.mxu0 0.0
  %183 = vmatpush2.msra.mxu0 0.0
  %184 = vmatprep.subr.mxu0 0.0
  %185 = vmatpush2.msra.mxu0 0.0
  %186 = vmatprep.subr.mxu0 0.0
  %187 = vmatpush2.msra.mxu0 0.0
  %188 = vmatprep.subr.mxu0 0.0
  %189 = vmatpush2.msra.mxu0 0.0
  %190 = vmatprep.subr.mxu0 0.0
  %191 = vmatpush2.msra.mxu0 0.0
  %192 = vmatprep.subr.mxu0 0.0
  %193 = vmatpush2.msra.mxu0 0.0
  %194 = vmatprep.subr.mxu0 0.0
  %195 = vmatpush2.msra.mxu0 0.0
  %196 = vmatprep.subr.mxu0 0.0
  %197 = vmatpush2.msra.mxu0 0.0
  %198 = vmatprep.subr.mxu0 0.0
  %199 = vmatpush2.msra.mxu0 0.0
  %200 = vmatprep.subr.mxu0 0.0
  %201 = vmatpush2.msra.mxu0 0.0
  %202 = vmatprep.subr.mxu0 0.0
  %203 = vmatpush2.msra.mxu0 0.0
  %204 = vmatprep.subr.mxu0 0.0
  %205 = vmatpush2.msra.mxu0 0.0
  %206 = vmatprep.subr.mxu0 0.0
  %207 = vmatpush2.msra.mxu0 0.0
  %208 = vmatprep.mubr.f32.mxu0 0.0
  %209 = vmatmul.mubr.f32.gmra.mxu0 %v139
  %v210 = vpop.f32.mrf.mxu0
  %v211 = vadd.f32 %v135, %v210
  %v212 = vpop.f32.mrf.mxu0
  %213 = vmatprep.mubr.f32.mxu0 0.0
  %214 = vmatmul.mubr.f32.gmra.mxu0 %v142
  %v215 = vpop.f32.mrf.mxu0
  %v216 = vadd.f32 %v135, %v215
  %v217 = vpop.f32.mrf.mxu0
  %218 = vdwg.mxu0
  %v219 = vtanh.pop %v211
  %v220 = vtanh.pop %v216
  %v221 = vld [vmem:[%s4] sm:$0xff]
  %v222 = vld [vmem:[%s4 + $0x8] sm:$0xff]
  %v223 = vld [vmem:[%s4 + $0x10] sm:$0xff]
  %v224 = vld [vmem:[%s4 + $0x18] sm:$0xff]
  %v225 = vld [vmem:[%s6] sm:$0x1]
  %v227 = vlaneseq
  %v228 = vshrl.u32 %v227, 7
  %v229 = vsub.s32 0, %v228
  %v230 = vrot.slane %v225, %v229
  %232 = vmatprep.subr.mxu0 0.0
  %233 = vmatpush1.msra.mxu0 0.0
  %234 = vmatprep.subr.mxu0 0.0
  %235 = vmatpush1.msra.mxu0 0.0
  %236 = vmatprep.subr.mxu0 0.0
  %237 = vmatpush1.msra.mxu0 0.0
  %238 = vmatprep.subr.mxu0 0.0
  %239 = vmatpush1.msra.mxu0 0.0
  %240 = vmatprep.subr.mxu0 0.0
  %241 = vmatpush1.msra.mxu0 0.0
  %242 = vmatprep.subr.mxu0 0.0
  %243 = vmatpush1.msra.mxu0 0.0
  %244 = vmatprep.subr.mxu0 0.0
  %245 = vmatpush1.msra.mxu0 0.0
  %246 = vmatprep.subr.mxu0 0.0
  %247 = vmatpush1.msra.mxu0 0.0
  %248 = vmatprep.subr.mxu0 0.0
  %249 = vmatpush1.msra.mxu0 0.0
  %250 = vmatprep.subr.mxu0 0.0
  %251 = vmatpush1.msra.mxu0 0.0
  %252 = vmatprep.subr.mxu0 0.0
  %253 = vmatpush1.msra.mxu0 0.0
  %254 = vmatprep.subr.mxu0 0.0
  %255 = vmatpush1.msra.mxu0 0.0
  %256 = vmatprep.subr.mxu0 0.0
  %257 = vmatpush1.msra.mxu0 %v224
  %258 = vmatprep.subr.mxu0 0.0
  %259 = vmatpush1.msra.mxu0 %v223
  %260 = vmatprep.subr.mxu0 0.0
  %261 = vmatpush1.msra.mxu0 %v222
  %262 = vmatprep.subr.mxu0 0.0
  %263 = vmatpush1.msra.mxu0 %v221
  %264 = vmatprep.subr.mxu0 0.0
  %265 = vmatpush2.msra.mxu0 0.0
  %266 = vmatprep.subr.mxu0 0.0
  %267 = vmatpush2.msra.mxu0 0.0
  %268 = vmatprep.subr.mxu0 0.0
  %269 = vmatpush2.msra.mxu0 0.0
  %270 = vmatprep.subr.mxu0 0.0
  %271 = vmatpush2.msra.mxu0 0.0
  %272 = vmatprep.subr.mxu0 0.0
  %273 = vmatpush2.msra.mxu0 0.0
  %274 = vmatprep.subr.mxu0 0.0
  %275 = vmatpush2.msra.mxu0 0.0
  %276 = vmatprep.subr.mxu0 0.0
  %277 = vmatpush2.msra.mxu0 0.0
  %278 = vmatprep.subr.mxu0 0.0
  %279 = vmatpush2.msra.mxu0 0.0
  %280 = vmatprep.subr.mxu0 0.0
  %281 = vmatpush2.msra.mxu0 0.0
  %282 = vmatprep.subr.mxu0 0.0
  %283 = vmatpush2.msra.mxu0 0.0
  %284 = vmatprep.subr.mxu0 0.0
  %285 = vmatpush2.msra.mxu0 0.0
  %286 = vmatprep.subr.mxu0 0.0
  %287 = vmatpush2.msra.mxu0 0.0
  %288 = vmatprep.subr.mxu0 0.0
  %289 = vmatpush2.msra.mxu0 0.0
  %290 = vmatprep.subr.mxu0 0.0
  %291 = vmatpush2.msra.mxu0 0.0
  %292 = vmatprep.subr.mxu0 0.0
  %293 = vmatpush2.msra.mxu0 0.0
  %294 = vmatprep.subr.mxu0 0.0
  %295 = vmatpush2.msra.mxu0 0.0
  %296 = vmatprep.mubr.f32.mxu0 0.0
  %297 = vmatmul.mubr.f32.gmra.mxu0 %v139
  %v298 = vpop.f32.mrf.mxu0
  %v299 = vadd.f32 %v230, %v298
  %v300 = vpop.f32.mrf.mxu0
  %301 = vmatprep.mubr.f32.mxu0 0.0
  %302 = vmatmul.mubr.f32.gmra.mxu0 %v142
  %v303 = vpop.f32.mrf.mxu0
  %v304 = vadd.f32 %v230, %v303
  %v305 = vpop.f32.mrf.mxu0
  %306 = vdwg.mxu0
  %309 = vrot.lane.b32.xlu0 %v299, 4
  %v310 = vpop.permute.xlu0 %309
  %311 = vrot.lane.b32.xlu0 %v304, 4
  %v312 = vpop.permute.xlu0 %311
  %v315 = vsub.f32 %v28, %v310
  %v316 = vsub.f32 %v29, %v312
  %v317 = vsub.f32 0.0, %v219
  %v318 = vsub.f32 0.0, %v220
  %v319 = vmul.f32 %v317, 1.442695
  %v320 = vpow.pop %v319
  %v321 = vmul.f32 %v318, 1.442695
  %v322 = vpow.pop %v321
  %325 = vrot.lane.b32.xlu0 %v320, 4
  %v326 = vpop.permute.xlu0 %325
  %327 = vrot.lane.b32.xlu0 %v322, 4
  %v328 = vpop.permute.xlu0 %327
  %v331 = vmul.f32 %v315, %v326
  %v332 = vmul.f32 %v316, %v328
  %v333 = vsel %vm38, %v219, 0.0
  %334 = vadd.xlane.f32.xlu0 %v333
  %v335 = vpop.xlane.xlu0 %334
  %v336 = vsel %vm38, %v220, 0.0
  %337 = vadd.xlane.f32.xlu0 %v336
  %v338 = vpop.xlane.xlu0 %337
  %v339 = vsub.f32 0.0, %v335
  %v340 = vsub.f32 0.0, %v338
  %s341 = scalar_lea.vmem %s1, 4
  %v342 = vld [vmem:[%s341] sm:$0xf]
  %s343 = scalar_lea.vmem %s2, 1
  %v344 = vld [vmem:[%s343] sm:$0x1]
  %v346 = vlaneseq
  %v347 = vshrl.u32 %v346, 7
  %v348 = vsub.s32 0, %v347
  %v349 = vrot.slane %v344, %v348
  %353 = vrot.lane.b32.xlu0 %v331, 124
  %v354 = vpop.permute.xlu0 %353
  %355 = vrot.lane.b32.xlu0 %v332, 124
  %v356 = vpop.permute.xlu0 %355
  %v357 = vsel %vm38, %v354, 0
  %v359 = vsel %vm38, %v356, 0
  %v362 = vsel %vm45, %v342, 0
  %364 = vmatprep.subr.mxu0 0.0
  %365 = vmatpush1.msra.mxu0 0.0
  %366 = vmatprep.subr.mxu0 0.0
  %367 = vmatpush1.msra.mxu0 0.0
  %368 = vmatprep.subr.mxu0 0.0
  %369 = vmatpush1.msra.mxu0 0.0
  %370 = vmatprep.subr.mxu0 0.0
  %371 = vmatpush1.msra.mxu0 0.0
  %372 = vmatprep.subr.mxu0 0.0
  %373 = vmatpush1.msra.mxu0 0.0
  %374 = vmatprep.subr.mxu0 0.0
  %375 = vmatpush1.msra.mxu0 0.0
  %376 = vmatprep.subr.mxu0 0.0
  %377 = vmatpush1.msra.mxu0 0.0
  %378 = vmatprep.subr.mxu0 0.0
  %379 = vmatpush1.msra.mxu0 0.0
  %380 = vmatprep.subr.mxu0 0.0
  %381 = vmatpush1.msra.mxu0 0.0
  %382 = vmatprep.subr.mxu0 0.0
  %383 = vmatpush1.msra.mxu0 0.0
  %384 = vmatprep.subr.mxu0 0.0
  %385 = vmatpush1.msra.mxu0 0.0
  %386 = vmatprep.subr.mxu0 0.0
  %387 = vmatpush1.msra.mxu0 0.0
  %388 = vmatprep.subr.mxu0 0.0
  %389 = vmatpush1.msra.mxu0 0.0
  %390 = vmatprep.subr.mxu0 0.0
  %391 = vmatpush1.msra.mxu0 0.0
  %392 = vmatprep.subr.mxu0 0.0
  %393 = vmatpush1.msra.mxu0 0.0
  %394 = vmatprep.subr.mxu0 0.0
  %395 = vmatpush1.msra.mxu0 %v362
  %396 = vmatprep.subr.mxu0 0.0
  %397 = vmatpush2.msra.mxu0 0.0
  %398 = vmatprep.subr.mxu0 0.0
  %399 = vmatpush2.msra.mxu0 0.0
  %400 = vmatprep.subr.mxu0 0.0
  %401 = vmatpush2.msra.mxu0 0.0
  %402 = vmatprep.subr.mxu0 0.0
  %403 = vmatpush2.msra.mxu0 0.0
  %404 = vmatprep.subr.mxu0 0.0
  %405 = vmatpush2.msra.mxu0 0.0
  %406 = vmatprep.subr.mxu0 0.0
  %407 = vmatpush2.msra.mxu0 0.0
  %408 = vmatprep.subr.mxu0 0.0
  %409 = vmatpush2.msra.mxu0 0.0
  %410 = vmatprep.subr.mxu0 0.0
  %411 = vmatpush2.msra.mxu0 0.0
  %412 = vmatprep.subr.mxu0 0.0
  %413 = vmatpush2.msra.mxu0 0.0
  %414 = vmatprep.subr.mxu0 0.0
  %415 = vmatpush2.msra.mxu0 0.0
  %416 = vmatprep.subr.mxu0 0.0
  %417 = vmatpush2.msra.mxu0 0.0
  %418 = vmatprep.subr.mxu0 0.0
  %419 = vmatpush2.msra.mxu0 0.0
  %420 = vmatprep.subr.mxu0 0.0
  %421 = vmatpush2.msra.mxu0 0.0
  %422 = vmatprep.subr.mxu0 0.0
  %423 = vmatpush2.msra.mxu0 0.0
  %424 = vmatprep.subr.mxu0 0.0
  %425 = vmatpush2.msra.mxu0 0.0
  %426 = vmatprep.subr.mxu0 0.0
  %427 = vmatpush2.msra.mxu0 0.0
  %428 = vmatprep.mubr.f32.mxu0 0.0
  %429 = vmatmul.mubr.f32.gmra.mxu0 %v357
  %v430 = vpop.f32.mrf.mxu0
  %v431 = vadd.f32 %v349, %v430
  %v432 = vpop.f32.mrf.mxu0
  %433 = vmatprep.mubr.f32.mxu0 0.0
  %434 = vmatmul.mubr.f32.gmra.mxu0 %v359
  %v435 = vpop.f32.mrf.mxu0
  %v436 = vadd.f32 %v349, %v435
  %v437 = vpop.f32.mrf.mxu0
  %438 = vdwg.mxu0
  %v439 = vtanh.pop %v431
  %v440 = vtanh.pop %v436
  %s441 = scalar_lea.vmem %s3, 32
  %v442 = vld [vmem:[%s441] sm:$0xff]
  %v443 = vld [vmem:[%s441 + $0x8] sm:$0xff]
  %v444 = vld [vmem:[%s441 + $0x10] sm:$0xff]
  %v445 = vld [vmem:[%s441 + $0x18] sm:$0xff]
  %s446 = scalar_lea.vmem %s5, 1
  %v447 = vld [vmem:[%s446] sm:$0x1]
  %v449 = vlaneseq
  %v450 = vshrl.u32 %v449, 7
  %v451 = vsub.s32 0, %v450
  %v452 = vrot.slane %v447, %v451
  %v455 = vsel %vm137, %v439, 0
  %v458 = vsel %vm137, %v440, 0
  %460 = vmatprep.subr.mxu0 0.0
  %461 = vmatpush1.msra.mxu0 0.0
  %462 = vmatprep.subr.mxu0 0.0
  %463 = vmatpush1.msra.mxu0 0.0
  %464 = vmatprep.subr.mxu0 0.0
  %465 = vmatpush1.msra.mxu0 0.0
  %466 = vmatprep.subr.mxu0 0.0
  %467 = vmatpush1.msra.mxu0 0.0
  %468 = vmatprep.subr.mxu0 0.0
  %469 = vmatpush1.msra.mxu0 0.0
  %470 = vmatprep.subr.mxu0 0.0
  %471 = vmatpush1.msra.mxu0 0.0
  %472 = vmatprep.subr.mxu0 0.0
  %473 = vmatpush1.msra.mxu0 0.0
  %474 = vmatprep.subr.mxu0 0.0
  %475 = vmatpush1.msra.mxu0 0.0
  %476 = vmatprep.subr.mxu0 0.0
  %477 = vmatpush1.msra.mxu0 0.0
  %478 = vmatprep.subr.mxu0 0.0
  %479 = vmatpush1.msra.mxu0 0.0
  %480 = vmatprep.subr.mxu0 0.0
  %481 = vmatpush1.msra.mxu0 0.0
  %482 = vmatprep.subr.mxu0 0.0
  %483 = vmatpush1.msra.mxu0 0.0
  %484 = vmatprep.subr.mxu0 0.0
  %485 = vmatpush1.msra.mxu0 %v445
  %486 = vmatprep.subr.mxu0 0.0
  %487 = vmatpush1.msra.mxu0 %v444
  %488 = vmatprep.subr.mxu0 0.0
  %489 = vmatpush1.msra.mxu0 %v443
  %490 = vmatprep.subr.mxu0 0.0
  %491 = vmatpush1.msra.mxu0 %v442
  %492 = vmatprep.subr.mxu0 0.0
  %493 = vmatpush2.msra.mxu0 0.0
  %494 = vmatprep.subr.mxu0 0.0
  %495 = vmatpush2.msra.mxu0 0.0
  %496 = vmatprep.subr.mxu0 0.0
  %497 = vmatpush2.msra.mxu0 0.0
  %498 = vmatprep.subr.mxu0 0.0
  %499 = vmatpush2.msra.mxu0 0.0
  %500 = vmatprep.subr.mxu0 0.0
  %501 = vmatpush2.msra.mxu0 0.0
  %502 = vmatprep.subr.mxu0 0.0
  %503 = vmatpush2.msra.mxu0 0.0
  %504 = vmatprep.subr.mxu0 0.0
  %505 = vmatpush2.msra.mxu0 0.0
  %506 = vmatprep.subr.mxu0 0.0
  %507 = vmatpush2.msra.mxu0 0.0
  %508 = vmatprep.subr.mxu0 0.0
  %509 = vmatpush2.msra.mxu0 0.0
  %510 = vmatprep.subr.mxu0 0.0
  %511 = vmatpush2.msra.mxu0 0.0
  %512 = vmatprep.subr.mxu0 0.0
  %513 = vmatpush2.msra.mxu0 0.0
  %514 = vmatprep.subr.mxu0 0.0
  %515 = vmatpush2.msra.mxu0 0.0
  %516 = vmatprep.subr.mxu0 0.0
  %517 = vmatpush2.msra.mxu0 0.0
  %518 = vmatprep.subr.mxu0 0.0
  %519 = vmatpush2.msra.mxu0 0.0
  %520 = vmatprep.subr.mxu0 0.0
  %521 = vmatpush2.msra.mxu0 0.0
  %522 = vmatprep.subr.mxu0 0.0
  %523 = vmatpush2.msra.mxu0 0.0
  %524 = vmatprep.mubr.f32.mxu0 0.0
  %525 = vmatmul.mubr.f32.gmra.mxu0 %v455
  %v526 = vpop.f32.mrf.mxu0
  %v527 = vadd.f32 %v452, %v526
  %v528 = vpop.f32.mrf.mxu0
  %529 = vmatprep.mubr.f32.mxu0 0.0
  %530 = vmatmul.mubr.f32.gmra.mxu0 %v458
  %v531 = vpop.f32.mrf.mxu0
  %v532 = vadd.f32 %v452, %v531
  %v533 = vpop.f32.mrf.mxu0
  %534 = vdwg.mxu0
  %v535 = vtanh.pop %v527
  %v536 = vtanh.pop %v532
  %s537 = scalar_lea.vmem %s4, 32
  %v538 = vld [vmem:[%s537] sm:$0xff]
  %v539 = vld [vmem:[%s537 + $0x8] sm:$0xff]
  %v540 = vld [vmem:[%s537 + $0x10] sm:$0xff]
  %v541 = vld [vmem:[%s537 + $0x18] sm:$0xff]
  %s542 = scalar_lea.vmem %s6, 1
  %v543 = vld [vmem:[%s542] sm:$0x1]
  %v545 = vlaneseq
  %v546 = vshrl.u32 %v545, 7
  %v547 = vsub.s32 0, %v546
  %v548 = vrot.slane %v543, %v547
  %550 = vmatprep.subr.mxu0 0.0
  %551 = vmatpush1.msra.mxu0 0.0
  %552 = vmatprep.subr.mxu0 0.0
  %553 = vmatpush1.msra.mxu0 0.0
  %554 = vmatprep.subr.mxu0 0.0
  %555 = vmatpush1.msra.mxu0 0.0
  %556 = vmatprep.subr.mxu0 0.0
  %557 = vmatpush1.msra.mxu0 0.0
  %558 = vmatprep.subr.mxu0 0.0
  %559 = vmatpush1.msra.mxu0 0.0
  %560 = vmatprep.subr.mxu0 0.0
  %561 = vmatpush1.msra.mxu0 0.0
  %562 = vmatprep.subr.mxu0 0.0
  %563 = vmatpush1.msra.mxu0 0.0
  %564 = vmatprep.subr.mxu0 0.0
  %565 = vmatpush1.msra.mxu0 0.0
  %566 = vmatprep.subr.mxu0 0.0
  %567 = vmatpush1.msra.mxu0 0.0
  %568 = vmatprep.subr.mxu0 0.0
  %569 = vmatpush1.msra.mxu0 0.0
  %570 = vmatprep.subr.mxu0 0.0
  %571 = vmatpush1.msra.mxu0 0.0
  %572 = vmatprep.subr.mxu0 0.0
  %573 = vmatpush1.msra.mxu0 0.0
  %574 = vmatprep.subr.mxu0 0.0
  %575 = vmatpush1.msra.mxu0 %v541
  %576 = vmatprep.subr.mxu0 0.0
  %577 = vmatpush1.msra.mxu0 %v540
  %578 = vmatprep.subr.mxu0 0.0
  %579 = vmatpush1.msra.mxu0 %v539
  %580 = vmatprep.subr.mxu0 0.0
  %581 = vmatpush1.msra.mxu0 %v538
  %582 = vmatprep.subr.mxu0 0.0
  %583 = vmatpush2.msra.mxu0 0.0
  %584 = vmatprep.subr.mxu0 0.0
  %585 = vmatpush2.msra.mxu0 0.0
  %586 = vmatprep.subr.mxu0 0.0
  %587 = vmatpush2.msra.mxu0 0.0
  %588 = vmatprep.subr.mxu0 0.0
  %589 = vmatpush2.msra.mxu0 0.0
  %590 = vmatprep.subr.mxu0 0.0
  %591 = vmatpush2.msra.mxu0 0.0
  %592 = vmatprep.subr.mxu0 0.0
  %593 = vmatpush2.msra.mxu0 0.0
  %594 = vmatprep.subr.mxu0 0.0
  %595 = vmatpush2.msra.mxu0 0.0
  %596 = vmatprep.subr.mxu0 0.0
  %597 = vmatpush2.msra.mxu0 0.0
  %598 = vmatprep.subr.mxu0 0.0
  %599 = vmatpush2.msra.mxu0 0.0
  %600 = vmatprep.subr.mxu0 0.0
  %601 = vmatpush2.msra.mxu0 0.0
  %602 = vmatprep.subr.mxu0 0.0
  %603 = vmatpush2.msra.mxu0 0.0
  %604 = vmatprep.subr.mxu0 0.0
  %605 = vmatpush2.msra.mxu0 0.0
  %606 = vmatprep.subr.mxu0 0.0
  %607 = vmatpush2.msra.mxu0 0.0
  %608 = vmatprep.subr.mxu0 0.0
  %609 = vmatpush2.msra.mxu0 0.0
  %610 = vmatprep.subr.mxu0 0.0
  %611 = vmatpush2.msra.mxu0 0.0
  %612 = vmatprep.subr.mxu0 0.0
  %613 = vmatpush2.msra.mxu0 0.0
  %614 = vmatprep.mubr.f32.mxu0 0.0
  %615 = vmatmul.mubr.f32.gmra.mxu0 %v455
  %v616 = vpop.f32.mrf.mxu0
  %v617 = vadd.f32 %v548, %v616
  %v618 = vpop.f32.mrf.mxu0
  %619 = vmatprep.mubr.f32.mxu0 0.0
  %620 = vmatmul.mubr.f32.gmra.mxu0 %v458
  %v621 = vpop.f32.mrf.mxu0
  %v622 = vadd.f32 %v548, %v621
  %v623 = vpop.f32.mrf.mxu0
  %624 = vdwg.mxu0
  %v625 = vsub.f32 %v28, %v617
  %v626 = vsub.f32 %v29, %v622
  %v627 = vsub.f32 0.0, %v535
  %v628 = vsub.f32 0.0, %v536
  %v629 = vmul.f32 %v627, 1.442695
  %v630 = vpow.pop %v629
  %v631 = vmul.f32 %v628, 1.442695
  %v632 = vpow.pop %v631
  %v633 = vmul.f32 %v625, %v630
  %v634 = vmul.f32 %v626, %v632
  %v635 = vsel %vm38, %v535, 0.0
  %636 = vadd.xlane.f32.xlu0 %v635
  %v637 = vpop.xlane.xlu0 %636
  %v638 = vsel %vm38, %v536, 0.0
  %639 = vadd.xlane.f32.xlu0 %v638
  %v640 = vpop.xlane.xlu0 %639
  %v641 = vsub.f32 0.0, %v637
  %v642 = vsub.f32 0.0, %v640
  %s643 = scalar_lea.vmem %s1, 8
  %v644 = vld [vmem:[%s643] sm:$0xf]
  %s645 = scalar_lea.vmem %s2, 2
  %v646 = vld [vmem:[%s645] sm:$0x1]
  %v648 = vlaneseq
  %v649 = vshrl.u32 %v648, 7
  %v650 = vsub.s32 0, %v649
  %v651 = vrot.slane %v646, %v650
  %v654 = vsel %vm38, %v633, 0
  %v657 = vsel %vm38, %v634, 0
  %v660 = vsel %vm45, %v644, 0
  %662 = vmatprep.subr.mxu0 0.0
  %663 = vmatpush1.msra.mxu0 0.0
  %664 = vmatprep.subr.mxu0 0.0
  %665 = vmatpush1.msra.mxu0 0.0
  %666 = vmatprep.subr.mxu0 0.0
  %667 = vmatpush1.msra.mxu0 0.0
  %668 = vmatprep.subr.mxu0 0.0
  %669 = vmatpush1.msra.mxu0 0.0
  %670 = vmatprep.subr.mxu0 0.0
  %671 = vmatpush1.msra.mxu0 0.0
  %672 = vmatprep.subr.mxu0 0.0
  %673 = vmatpush1.msra.mxu0 0.0
  %674 = vmatprep.subr.mxu0 0.0
  %675 = vmatpush1.msra.mxu0 0.0
  %676 = vmatprep.subr.mxu0 0.0
  %677 = vmatpush1.msra.mxu0 0.0
  %678 = vmatprep.subr.mxu0 0.0
  %679 = vmatpush1.msra.mxu0 0.0
  %680 = vmatprep.subr.mxu0 0.0
  %681 = vmatpush1.msra.mxu0 0.0
  %682 = vmatprep.subr.mxu0 0.0
  %683 = vmatpush1.msra.mxu0 0.0
  %684 = vmatprep.subr.mxu0 0.0
  %685 = vmatpush1.msra.mxu0 0.0
  %686 = vmatprep.subr.mxu0 0.0
  %687 = vmatpush1.msra.mxu0 0.0
  %688 = vmatprep.subr.mxu0 0.0
  %689 = vmatpush1.msra.mxu0 0.0
  %690 = vmatprep.subr.mxu0 0.0
  %691 = vmatpush1.msra.mxu0 0.0
  %692 = vmatprep.subr.mxu0 0.0
  %693 = vmatpush1.msra.mxu0 %v660
  %694 = vmatprep.subr.mxu0 0.0
  %695 = vmatpush2.msra.mxu0 0.0
  %696 = vmatprep.subr.mxu0 0.0
  %697 = vmatpush2.msra.mxu0 0.0
  %698 = vmatprep.subr.mxu0 0.0
  %699 = vmatpush2.msra.mxu0 0.0
  %700 = vmatprep.subr.mxu0 0.0
  %701 = vmatpush2.msra.mxu0 0.0
  %702 = vmatprep.subr.mxu0 0.0
  %703 = vmatpush2.msra.mxu0 0.0
  %704 = vmatprep.subr.mxu0 0.0
  %705 = vmatpush2.msra.mxu0 0.0
  %706 = vmatprep.subr.mxu0 0.0
  %707 = vmatpush2.msra.mxu0 0.0
  %708 = vmatprep.subr.mxu0 0.0
  %709 = vmatpush2.msra.mxu0 0.0
  %710 = vmatprep.subr.mxu0 0.0
  %711 = vmatpush2.msra.mxu0 0.0
  %712 = vmatprep.subr.mxu0 0.0
  %713 = vmatpush2.msra.mxu0 0.0
  %714 = vmatprep.subr.mxu0 0.0
  %715 = vmatpush2.msra.mxu0 0.0
  %716 = vmatprep.subr.mxu0 0.0
  %717 = vmatpush2.msra.mxu0 0.0
  %718 = vmatprep.subr.mxu0 0.0
  %719 = vmatpush2.msra.mxu0 0.0
  %720 = vmatprep.subr.mxu0 0.0
  %721 = vmatpush2.msra.mxu0 0.0
  %722 = vmatprep.subr.mxu0 0.0
  %723 = vmatpush2.msra.mxu0 0.0
  %724 = vmatprep.subr.mxu0 0.0
  %725 = vmatpush2.msra.mxu0 0.0
  %726 = vmatprep.mubr.f32.mxu0 0.0
  %727 = vmatmul.mubr.f32.gmra.mxu0 %v654
  %v728 = vpop.f32.mrf.mxu0
  %v729 = vadd.f32 %v651, %v728
  %v730 = vpop.f32.mrf.mxu0
  %731 = vmatprep.mubr.f32.mxu0 0.0
  %732 = vmatmul.mubr.f32.gmra.mxu0 %v657
  %v733 = vpop.f32.mrf.mxu0
  %v734 = vadd.f32 %v651, %v733
  %v735 = vpop.f32.mrf.mxu0
  %736 = vdwg.mxu0
  %v737 = vtanh.pop %v729
  %v738 = vtanh.pop %v734
  %s739 = scalar_lea.vmem %s3, 64
  %v740 = vld [vmem:[%s739] sm:$0xff]
  %v741 = vld [vmem:[%s739 + $0x8] sm:$0xff]
  %v742 = vld [vmem:[%s739 + $0x10] sm:$0xff]
  %v743 = vld [vmem:[%s739 + $0x18] sm:$0xff]
  %s744 = scalar_lea.vmem %s5, 2
  %v745 = vld [vmem:[%s744] sm:$0x1]
  %v747 = vlaneseq
  %v748 = vshrl.u32 %v747, 7
  %v749 = vsub.s32 0, %v748
  %v750 = vrot.slane %v745, %v749
  %v753 = vsel %vm137, %v737, 0
  %v756 = vsel %vm137, %v738, 0
  %758 = vmatprep.subr.mxu0 0.0
  %759 = vmatpush1.msra.mxu0 0.0
  %760 = vmatprep.subr.mxu0 0.0
  %761 = vmatpush1.msra.mxu0 0.0
  %762 = vmatprep.subr.mxu0 0.0
  %763 = vmatpush1.msra.mxu0 0.0
  %764 = vmatprep.subr.mxu0 0.0
  %765 = vmatpush1.msra.mxu0 0.0
  %766 = vmatprep.subr.mxu0 0.0
  %767 = vmatpush1.msra.mxu0 0.0
  %768 = vmatprep.subr.mxu0 0.0
  %769 = vmatpush1.msra.mxu0 0.0
  %770 = vmatprep.subr.mxu0 0.0
  %771 = vmatpush1.msra.mxu0 0.0
  %772 = vmatprep.subr.mxu0 0.0
  %773 = vmatpush1.msra.mxu0 0.0
  %774 = vmatprep.subr.mxu0 0.0
  %775 = vmatpush1.msra.mxu0 0.0
  %776 = vmatprep.subr.mxu0 0.0
  %777 = vmatpush1.msra.mxu0 0.0
  %778 = vmatprep.subr.mxu0 0.0
  %779 = vmatpush1.msra.mxu0 0.0
  %780 = vmatprep.subr.mxu0 0.0
  %781 = vmatpush1.msra.mxu0 0.0
  %782 = vmatprep.subr.mxu0 0.0
  %783 = vmatpush1.msra.mxu0 %v743
  %784 = vmatprep.subr.mxu0 0.0
  %785 = vmatpush1.msra.mxu0 %v742
  %786 = vmatprep.subr.mxu0 0.0
  %787 = vmatpush1.msra.mxu0 %v741
  %788 = vmatprep.subr.mxu0 0.0
  %789 = vmatpush1.msra.mxu0 %v740
  %790 = vmatprep.subr.mxu0 0.0
  %791 = vmatpush2.msra.mxu0 0.0
  %792 = vmatprep.subr.mxu0 0.0
  %793 = vmatpush2.msra.mxu0 0.0
  %794 = vmatprep.subr.mxu0 0.0
  %795 = vmatpush2.msra.mxu0 0.0
  %796 = vmatprep.subr.mxu0 0.0
  %797 = vmatpush2.msra.mxu0 0.0
  %798 = vmatprep.subr.mxu0 0.0
  %799 = vmatpush2.msra.mxu0 0.0
  %800 = vmatprep.subr.mxu0 0.0
  %801 = vmatpush2.msra.mxu0 0.0
  %802 = vmatprep.subr.mxu0 0.0
  %803 = vmatpush2.msra.mxu0 0.0
  %804 = vmatprep.subr.mxu0 0.0
  %805 = vmatpush2.msra.mxu0 0.0
  %806 = vmatprep.subr.mxu0 0.0
  %807 = vmatpush2.msra.mxu0 0.0
  %808 = vmatprep.subr.mxu0 0.0
  %809 = vmatpush2.msra.mxu0 0.0
  %810 = vmatprep.subr.mxu0 0.0
  %811 = vmatpush2.msra.mxu0 0.0
  %812 = vmatprep.subr.mxu0 0.0
  %813 = vmatpush2.msra.mxu0 0.0
  %814 = vmatprep.subr.mxu0 0.0
  %815 = vmatpush2.msra.mxu0 0.0
  %816 = vmatprep.subr.mxu0 0.0
  %817 = vmatpush2.msra.mxu0 0.0
  %818 = vmatprep.subr.mxu0 0.0
  %819 = vmatpush2.msra.mxu0 0.0
  %820 = vmatprep.subr.mxu0 0.0
  %821 = vmatpush2.msra.mxu0 0.0
  %822 = vmatprep.mubr.f32.mxu0 0.0
  %823 = vmatmul.mubr.f32.gmra.mxu0 %v753
  %v824 = vpop.f32.mrf.mxu0
  %v825 = vadd.f32 %v750, %v824
  %v826 = vpop.f32.mrf.mxu0
  %827 = vmatprep.mubr.f32.mxu0 0.0
  %828 = vmatmul.mubr.f32.gmra.mxu0 %v756
  %v829 = vpop.f32.mrf.mxu0
  %v830 = vadd.f32 %v750, %v829
  %v831 = vpop.f32.mrf.mxu0
  %832 = vdwg.mxu0
  %v833 = vtanh.pop %v825
  %v834 = vtanh.pop %v830
  %s835 = scalar_lea.vmem %s4, 64
  %v836 = vld [vmem:[%s835] sm:$0xff]
  %v837 = vld [vmem:[%s835 + $0x8] sm:$0xff]
  %v838 = vld [vmem:[%s835 + $0x10] sm:$0xff]
  %v839 = vld [vmem:[%s835 + $0x18] sm:$0xff]
  %s840 = scalar_lea.vmem %s6, 2
  %v841 = vld [vmem:[%s840] sm:$0x1]
  %v843 = vlaneseq
  %v844 = vshrl.u32 %v843, 7
  %v845 = vsub.s32 0, %v844
  %v846 = vrot.slane %v841, %v845
  %848 = vmatprep.subr.mxu0 0.0
  %849 = vmatpush1.msra.mxu0 0.0
  %850 = vmatprep.subr.mxu0 0.0
  %851 = vmatpush1.msra.mxu0 0.0
  %852 = vmatprep.subr.mxu0 0.0
  %853 = vmatpush1.msra.mxu0 0.0
  %854 = vmatprep.subr.mxu0 0.0
  %855 = vmatpush1.msra.mxu0 0.0
  %856 = vmatprep.subr.mxu0 0.0
  %857 = vmatpush1.msra.mxu0 0.0
  %858 = vmatprep.subr.mxu0 0.0
  %859 = vmatpush1.msra.mxu0 0.0
  %860 = vmatprep.subr.mxu0 0.0
  %861 = vmatpush1.msra.mxu0 0.0
  %862 = vmatprep.subr.mxu0 0.0
  %863 = vmatpush1.msra.mxu0 0.0
  %864 = vmatprep.subr.mxu0 0.0
  %865 = vmatpush1.msra.mxu0 0.0
  %866 = vmatprep.subr.mxu0 0.0
  %867 = vmatpush1.msra.mxu0 0.0
  %868 = vmatprep.subr.mxu0 0.0
  %869 = vmatpush1.msra.mxu0 0.0
  %870 = vmatprep.subr.mxu0 0.0
  %871 = vmatpush1.msra.mxu0 0.0
  %872 = vmatprep.subr.mxu0 0.0
  %873 = vmatpush1.msra.mxu0 %v839
  %874 = vmatprep.subr.mxu0 0.0
  %875 = vmatpush1.msra.mxu0 %v838
  %876 = vmatprep.subr.mxu0 0.0
  %877 = vmatpush1.msra.mxu0 %v837
  %878 = vmatprep.subr.mxu0 0.0
  %879 = vmatpush1.msra.mxu0 %v836
  %880 = vmatprep.subr.mxu0 0.0
  %881 = vmatpush2.msra.mxu0 0.0
  %882 = vmatprep.subr.mxu0 0.0
  %883 = vmatpush2.msra.mxu0 0.0
  %884 = vmatprep.subr.mxu0 0.0
  %885 = vmatpush2.msra.mxu0 0.0
  %886 = vmatprep.subr.mxu0 0.0
  %887 = vmatpush2.msra.mxu0 0.0
  %888 = vmatprep.subr.mxu0 0.0
  %889 = vmatpush2.msra.mxu0 0.0
  %890 = vmatprep.subr.mxu0 0.0
  %891 = vmatpush2.msra.mxu0 0.0
  %892 = vmatprep.subr.mxu0 0.0
  %893 = vmatpush2.msra.mxu0 0.0
  %894 = vmatprep.subr.mxu0 0.0
  %895 = vmatpush2.msra.mxu0 0.0
  %896 = vmatprep.subr.mxu0 0.0
  %897 = vmatpush2.msra.mxu0 0.0
  %898 = vmatprep.subr.mxu0 0.0
  %899 = vmatpush2.msra.mxu0 0.0
  %900 = vmatprep.subr.mxu0 0.0
  %901 = vmatpush2.msra.mxu0 0.0
  %902 = vmatprep.subr.mxu0 0.0
  %903 = vmatpush2.msra.mxu0 0.0
  %904 = vmatprep.subr.mxu0 0.0
  %905 = vmatpush2.msra.mxu0 0.0
  %906 = vmatprep.subr.mxu0 0.0
  %907 = vmatpush2.msra.mxu0 0.0
  %908 = vmatprep.subr.mxu0 0.0
  %909 = vmatpush2.msra.mxu0 0.0
  %910 = vmatprep.subr.mxu0 0.0
  %911 = vmatpush2.msra.mxu0 0.0
  %912 = vmatprep.mubr.f32.mxu0 0.0
  %913 = vmatmul.mubr.f32.gmra.mxu0 %v753
  %v914 = vpop.f32.mrf.mxu0
  %v915 = vadd.f32 %v846, %v914
  %v916 = vpop.f32.mrf.mxu0
  %917 = vmatprep.mubr.f32.mxu0 0.0
  %918 = vmatmul.mubr.f32.gmra.mxu0 %v756
  %v919 = vpop.f32.mrf.mxu0
  %v920 = vadd.f32 %v846, %v919
  %v921 = vpop.f32.mrf.mxu0
  %922 = vdwg.mxu0
  %925 = vrot.lane.b32.xlu0 %v915, 4
  %v926 = vpop.permute.xlu0 %925
  %927 = vrot.lane.b32.xlu0 %v920, 4
  %v928 = vpop.permute.xlu0 %927
  %v931 = vsub.f32 %v331, %v926
  %v932 = vsub.f32 %v332, %v928
  %v933 = vsub.f32 0.0, %v833
  %v934 = vsub.f32 0.0, %v834
  %v935 = vmul.f32 %v933, 1.442695
  %v936 = vpow.pop %v935
  %v937 = vmul.f32 %v934, 1.442695
  %v938 = vpow.pop %v937
  %941 = vrot.lane.b32.xlu0 %v936, 4
  %v942 = vpop.permute.xlu0 %941
  %943 = vrot.lane.b32.xlu0 %v938, 4
  %v944 = vpop.permute.xlu0 %943
  %v947 = vmul.f32 %v931, %v942
  %v948 = vmul.f32 %v932, %v944
  %v949 = vsel %vm38, %v833, 0.0
  %950 = vadd.xlane.f32.xlu0 %v949
  %v951 = vpop.xlane.xlu0 %950
  %v952 = vsel %vm38, %v834, 0.0
  %953 = vadd.xlane.f32.xlu0 %v952
  %v954 = vpop.xlane.xlu0 %953
  %v955 = vsub.f32 0.0, %v951
  %v956 = vsub.f32 0.0, %v954
  %s957 = scalar_lea.vmem %s1, 12
  %v958 = vld [vmem:[%s957] sm:$0xf]
  %s959 = scalar_lea.vmem %s2, 3
  %v960 = vld [vmem:[%s959] sm:$0x1]
  %v962 = vlaneseq
  %v963 = vshrl.u32 %v962, 7
  %v964 = vsub.s32 0, %v963
  %v965 = vrot.slane %v960, %v964
  %969 = vrot.lane.b32.xlu0 %v947, 124
  %v970 = vpop.permute.xlu0 %969
  %971 = vrot.lane.b32.xlu0 %v948, 124
  %v972 = vpop.permute.xlu0 %971
  %v973 = vsel %vm38, %v970, 0
  %v975 = vsel %vm38, %v972, 0
  %v978 = vsel %vm45, %v958, 0
  %980 = vmatprep.subr.mxu0 0.0
  %981 = vmatpush1.msra.mxu0 0.0
  %982 = vmatprep.subr.mxu0 0.0
  %983 = vmatpush1.msra.mxu0 0.0
  %984 = vmatprep.subr.mxu0 0.0
  %985 = vmatpush1.msra.mxu0 0.0
  %986 = vmatprep.subr.mxu0 0.0
  %987 = vmatpush1.msra.mxu0 0.0
  %988 = vmatprep.subr.mxu0 0.0
  %989 = vmatpush1.msra.mxu0 0.0
  %990 = vmatprep.subr.mxu0 0.0
  %991 = vmatpush1.msra.mxu0 0.0
  %992 = vmatprep.subr.mxu0 0.0
  %993 = vmatpush1.msra.mxu0 0.0
  %994 = vmatprep.subr.mxu0 0.0
  %995 = vmatpush1.msra.mxu0 0.0
  %996 = vmatprep.subr.mxu0 0.0
  %997 = vmatpush1.msra.mxu0 0.0
  %998 = vmatprep.subr.mxu0 0.0
  %999 = vmatpush1.msra.mxu0 0.0
  %1000 = vmatprep.subr.mxu0 0.0
  %1001 = vmatpush1.msra.mxu0 0.0
  %1002 = vmatprep.subr.mxu0 0.0
  %1003 = vmatpush1.msra.mxu0 0.0
  %1004 = vmatprep.subr.mxu0 0.0
  %1005 = vmatpush1.msra.mxu0 0.0
  %1006 = vmatprep.subr.mxu0 0.0
  %1007 = vmatpush1.msra.mxu0 0.0
  %1008 = vmatprep.subr.mxu0 0.0
  %1009 = vmatpush1.msra.mxu0 0.0
  %1010 = vmatprep.subr.mxu0 0.0
  %1011 = vmatpush1.msra.mxu0 %v978
  %1012 = vmatprep.subr.mxu0 0.0
  %1013 = vmatpush2.msra.mxu0 0.0
  %1014 = vmatprep.subr.mxu0 0.0
  %1015 = vmatpush2.msra.mxu0 0.0
  %1016 = vmatprep.subr.mxu0 0.0
  %1017 = vmatpush2.msra.mxu0 0.0
  %1018 = vmatprep.subr.mxu0 0.0
  %1019 = vmatpush2.msra.mxu0 0.0
  %1020 = vmatprep.subr.mxu0 0.0
  %1021 = vmatpush2.msra.mxu0 0.0
  %1022 = vmatprep.subr.mxu0 0.0
  %1023 = vmatpush2.msra.mxu0 0.0
  %1024 = vmatprep.subr.mxu0 0.0
  %1025 = vmatpush2.msra.mxu0 0.0
  %1026 = vmatprep.subr.mxu0 0.0
  %1027 = vmatpush2.msra.mxu0 0.0
  %1028 = vmatprep.subr.mxu0 0.0
  %1029 = vmatpush2.msra.mxu0 0.0
  %1030 = vmatprep.subr.mxu0 0.0
  %1031 = vmatpush2.msra.mxu0 0.0
  %1032 = vmatprep.subr.mxu0 0.0
  %1033 = vmatpush2.msra.mxu0 0.0
  %1034 = vmatprep.subr.mxu0 0.0
  %1035 = vmatpush2.msra.mxu0 0.0
  %1036 = vmatprep.subr.mxu0 0.0
  %1037 = vmatpush2.msra.mxu0 0.0
  %1038 = vmatprep.subr.mxu0 0.0
  %1039 = vmatpush2.msra.mxu0 0.0
  %1040 = vmatprep.subr.mxu0 0.0
  %1041 = vmatpush2.msra.mxu0 0.0
  %1042 = vmatprep.subr.mxu0 0.0
  %1043 = vmatpush2.msra.mxu0 0.0
  %1044 = vmatprep.mubr.f32.mxu0 0.0
  %1045 = vmatmul.mubr.f32.gmra.mxu0 %v973
  %v1046 = vpop.f32.mrf.mxu0
  %v1047 = vadd.f32 %v965, %v1046
  %v1048 = vpop.f32.mrf.mxu0
  %1049 = vmatprep.mubr.f32.mxu0 0.0
  %1050 = vmatmul.mubr.f32.gmra.mxu0 %v975
  %v1051 = vpop.f32.mrf.mxu0
  %v1052 = vadd.f32 %v965, %v1051
  %v1053 = vpop.f32.mrf.mxu0
  %1054 = vdwg.mxu0
  %v1055 = vtanh.pop %v1047
  %v1056 = vtanh.pop %v1052
  %s1057 = scalar_lea.vmem %s3, 96
  %v1058 = vld [vmem:[%s1057] sm:$0xff]
  %v1059 = vld [vmem:[%s1057 + $0x8] sm:$0xff]
  %v1060 = vld [vmem:[%s1057 + $0x10] sm:$0xff]
  %v1061 = vld [vmem:[%s1057 + $0x18] sm:$0xff]
  %s1062 = scalar_lea.vmem %s5, 3
  %v1063 = vld [vmem:[%s1062] sm:$0x1]
  %v1065 = vlaneseq
  %v1066 = vshrl.u32 %v1065, 7
  %v1067 = vsub.s32 0, %v1066
  %v1068 = vrot.slane %v1063, %v1067
  %v1071 = vsel %vm137, %v1055, 0
  %v1074 = vsel %vm137, %v1056, 0
  %1076 = vmatprep.subr.mxu0 0.0
  %1077 = vmatpush1.msra.mxu0 0.0
  %1078 = vmatprep.subr.mxu0 0.0
  %1079 = vmatpush1.msra.mxu0 0.0
  %1080 = vmatprep.subr.mxu0 0.0
  %1081 = vmatpush1.msra.mxu0 0.0
  %1082 = vmatprep.subr.mxu0 0.0
  %1083 = vmatpush1.msra.mxu0 0.0
  %1084 = vmatprep.subr.mxu0 0.0
  %1085 = vmatpush1.msra.mxu0 0.0
  %1086 = vmatprep.subr.mxu0 0.0
  %1087 = vmatpush1.msra.mxu0 0.0
  %1088 = vmatprep.subr.mxu0 0.0
  %1089 = vmatpush1.msra.mxu0 0.0
  %1090 = vmatprep.subr.mxu0 0.0
  %1091 = vmatpush1.msra.mxu0 0.0
  %1092 = vmatprep.subr.mxu0 0.0
  %1093 = vmatpush1.msra.mxu0 0.0
  %1094 = vmatprep.subr.mxu0 0.0
  %1095 = vmatpush1.msra.mxu0 0.0
  %1096 = vmatprep.subr.mxu0 0.0
  %1097 = vmatpush1.msra.mxu0 0.0
  %1098 = vmatprep.subr.mxu0 0.0
  %1099 = vmatpush1.msra.mxu0 0.0
  %1100 = vmatprep.subr.mxu0 0.0
  %1101 = vmatpush1.msra.mxu0 %v1061
  %1102 = vmatprep.subr.mxu0 0.0
  %1103 = vmatpush1.msra.mxu0 %v1060
  %1104 = vmatprep.subr.mxu0 0.0
  %1105 = vmatpush1.msra.mxu0 %v1059
  %1106 = vmatprep.subr.mxu0 0.0
  %1107 = vmatpush1.msra.mxu0 %v1058
  %1108 = vmatprep.subr.mxu0 0.0
  %1109 = vmatpush2.msra.mxu0 0.0
  %1110 = vmatprep.subr.mxu0 0.0
  %1111 = vmatpush2.msra.mxu0 0.0
  %1112 = vmatprep.subr.mxu0 0.0
  %1113 = vmatpush2.msra.mxu0 0.0
  %1114 = vmatprep.subr.mxu0 0.0
  %1115 = vmatpush2.msra.mxu0 0.0
  %1116 = vmatprep.subr.mxu0 0.0
  %1117 = vmatpush2.msra.mxu0 0.0
  %1118 = vmatprep.subr.mxu0 0.0
  %1119 = vmatpush2.msra.mxu0 0.0
  %1120 = vmatprep.subr.mxu0 0.0
  %1121 = vmatpush2.msra.mxu0 0.0
  %1122 = vmatprep.subr.mxu0 0.0
  %1123 = vmatpush2.msra.mxu0 0.0
  %1124 = vmatprep.subr.mxu0 0.0
  %1125 = vmatpush2.msra.mxu0 0.0
  %1126 = vmatprep.subr.mxu0 0.0
  %1127 = vmatpush2.msra.mxu0 0.0
  %1128 = vmatprep.subr.mxu0 0.0
  %1129 = vmatpush2.msra.mxu0 0.0
  %1130 = vmatprep.subr.mxu0 0.0
  %1131 = vmatpush2.msra.mxu0 0.0
  %1132 = vmatprep.subr.mxu0 0.0
  %1133 = vmatpush2.msra.mxu0 0.0
  %1134 = vmatprep.subr.mxu0 0.0
  %1135 = vmatpush2.msra.mxu0 0.0
  %1136 = vmatprep.subr.mxu0 0.0
  %1137 = vmatpush2.msra.mxu0 0.0
  %1138 = vmatprep.subr.mxu0 0.0
  %1139 = vmatpush2.msra.mxu0 0.0
  %1140 = vmatprep.mubr.f32.mxu0 0.0
  %1141 = vmatmul.mubr.f32.gmra.mxu0 %v1071
  %v1142 = vpop.f32.mrf.mxu0
  %v1143 = vadd.f32 %v1068, %v1142
  %v1144 = vpop.f32.mrf.mxu0
  %1145 = vmatprep.mubr.f32.mxu0 0.0
  %1146 = vmatmul.mubr.f32.gmra.mxu0 %v1074
  %v1147 = vpop.f32.mrf.mxu0
  %v1148 = vadd.f32 %v1068, %v1147
  %v1149 = vpop.f32.mrf.mxu0
  %1150 = vdwg.mxu0
  %v1151 = vtanh.pop %v1143
  %v1152 = vtanh.pop %v1148
  %s1153 = scalar_lea.vmem %s4, 96
  %v1154 = vld [vmem:[%s1153] sm:$0xff]
  %v1155 = vld [vmem:[%s1153 + $0x8] sm:$0xff]
  %v1156 = vld [vmem:[%s1153 + $0x10] sm:$0xff]
  %v1157 = vld [vmem:[%s1153 + $0x18] sm:$0xff]
  %s1158 = scalar_lea.vmem %s6, 3
  %v1159 = vld [vmem:[%s1158] sm:$0x1]
  %v1161 = vlaneseq
  %v1162 = vshrl.u32 %v1161, 7
  %v1163 = vsub.s32 0, %v1162
  %v1164 = vrot.slane %v1159, %v1163
  %1166 = vmatprep.subr.mxu0 0.0
  %1167 = vmatpush1.msra.mxu0 0.0
  %1168 = vmatprep.subr.mxu0 0.0
  %1169 = vmatpush1.msra.mxu0 0.0
  %1170 = vmatprep.subr.mxu0 0.0
  %1171 = vmatpush1.msra.mxu0 0.0
  %1172 = vmatprep.subr.mxu0 0.0
  %1173 = vmatpush1.msra.mxu0 0.0
  %1174 = vmatprep.subr.mxu0 0.0
  %1175 = vmatpush1.msra.mxu0 0.0
  %1176 = vmatprep.subr.mxu0 0.0
  %1177 = vmatpush1.msra.mxu0 0.0
  %1178 = vmatprep.subr.mxu0 0.0
  %1179 = vmatpush1.msra.mxu0 0.0
  %1180 = vmatprep.subr.mxu0 0.0
  %1181 = vmatpush1.msra.mxu0 0.0
  %1182 = vmatprep.subr.mxu0 0.0
  %1183 = vmatpush1.msra.mxu0 0.0
  %1184 = vmatprep.subr.mxu0 0.0
  %1185 = vmatpush1.msra.mxu0 0.0
  %1186 = vmatprep.subr.mxu0 0.0
  %1187 = vmatpush1.msra.mxu0 0.0
  %1188 = vmatprep.subr.mxu0 0.0
  %1189 = vmatpush1.msra.mxu0 0.0
  %1190 = vmatprep.subr.mxu0 0.0
  %1191 = vmatpush1.msra.mxu0 %v1157
  %1192 = vmatprep.subr.mxu0 0.0
  %1193 = vmatpush1.msra.mxu0 %v1156
  %1194 = vmatprep.subr.mxu0 0.0
  %1195 = vmatpush1.msra.mxu0 %v1155
  %1196 = vmatprep.subr.mxu0 0.0
  %1197 = vmatpush1.msra.mxu0 %v1154
  %1198 = vmatprep.subr.mxu0 0.0
  %1199 = vmatpush2.msra.mxu0 0.0
  %1200 = vmatprep.subr.mxu0 0.0
  %1201 = vmatpush2.msra.mxu0 0.0
  %1202 = vmatprep.subr.mxu0 0.0
  %1203 = vmatpush2.msra.mxu0 0.0
  %1204 = vmatprep.subr.mxu0 0.0
  %1205 = vmatpush2.msra.mxu0 0.0
  %1206 = vmatprep.subr.mxu0 0.0
  %1207 = vmatpush2.msra.mxu0 0.0
  %1208 = vmatprep.subr.mxu0 0.0
  %1209 = vmatpush2.msra.mxu0 0.0
  %1210 = vmatprep.subr.mxu0 0.0
  %1211 = vmatpush2.msra.mxu0 0.0
  %1212 = vmatprep.subr.mxu0 0.0
  %1213 = vmatpush2.msra.mxu0 0.0
  %1214 = vmatprep.subr.mxu0 0.0
  %1215 = vmatpush2.msra.mxu0 0.0
  %1216 = vmatprep.subr.mxu0 0.0
  %1217 = vmatpush2.msra.mxu0 0.0
  %1218 = vmatprep.subr.mxu0 0.0
  %1219 = vmatpush2.msra.mxu0 0.0
  %1220 = vmatprep.subr.mxu0 0.0
  %1221 = vmatpush2.msra.mxu0 0.0
  %1222 = vmatprep.subr.mxu0 0.0
  %1223 = vmatpush2.msra.mxu0 0.0
  %1224 = vmatprep.subr.mxu0 0.0
  %1225 = vmatpush2.msra.mxu0 0.0
  %1226 = vmatprep.subr.mxu0 0.0
  %1227 = vmatpush2.msra.mxu0 0.0
  %1228 = vmatprep.subr.mxu0 0.0
  %1229 = vmatpush2.msra.mxu0 0.0
  %1230 = vmatprep.mubr.f32.mxu0 0.0
  %1231 = vmatmul.mubr.f32.gmra.mxu0 %v1071
  %v1232 = vpop.f32.mrf.mxu0
  %v1233 = vadd.f32 %v1164, %v1232
  %v1234 = vpop.f32.mrf.mxu0
  %1235 = vmatprep.mubr.f32.mxu0 0.0
  %1236 = vmatmul.mubr.f32.gmra.mxu0 %v1074
  %v1237 = vpop.f32.mrf.mxu0
  %v1238 = vadd.f32 %v1164, %v1237
  %v1239 = vpop.f32.mrf.mxu0
  %1240 = vdwg.mxu0
  %v1241 = vsub.f32 %v633, %v1233
  %v1242 = vsub.f32 %v634, %v1238
  %v1243 = vsub.f32 0.0, %v1151
  %v1244 = vsub.f32 0.0, %v1152
  %v1245 = vmul.f32 %v1243, 1.442695
  %v1246 = vpow.pop %v1245
  %v1247 = vmul.f32 %v1244, 1.442695
  %v1248 = vpow.pop %v1247
  %v1249 = vmul.f32 %v1241, %v1246
  %v1250 = vmul.f32 %v1242, %v1248
  %v1251 = vsel %vm38, %v1151, 0.0
  %1252 = vadd.xlane.f32.xlu0 %v1251
  %v1253 = vpop.xlane.xlu0 %1252
  %v1254 = vsel %vm38, %v1152, 0.0
  %1255 = vadd.xlane.f32.xlu0 %v1254
  %v1256 = vpop.xlane.xlu0 %1255
  %v1257 = vsub.f32 0.0, %v1253
  %v1258 = vsub.f32 0.0, %v1256
  %1259 = vst.msk [vmem:[%s7] sm:$0xff] %vm38, %v1249
  %1260 = vst.msk [vmem:[%s7 + $0x8] sm:$0xff] %vm38, %v1250
  %vm1261 = vcmask 64544
  %1262 = vst.msk [vmem:[%s7] sm:$0xff] %vm1261, %v947
  %1263 = vst.msk [vmem:[%s7 + $0x8] sm:$0xff] %vm1261, %v948
  %v1264 = vlaneseq
  %v1265 = vand.u32 %v1264, 127
  %vm1266 = vcmp.eq.s32.totalorder %v1265, 0
  %v1267 = vsel %vm1266, %v339, 0.0
  %v1268 = vsel %vm1266, %v340, 0.0
  %vm1269 = vcmp.eq.s32.totalorder %v1265, 1
  %v1270 = vsel %vm1269, %v641, %v1267
  %v1271 = vsel %vm1269, %v642, %v1268
  %vm1272 = vcmp.eq.s32.totalorder %v1265, 2
  %v1273 = vsel %vm1272, %v955, %v1270
  %v1274 = vsel %vm1272, %v956, %v1271
  %vm1275 = vcmp.eq.s32.totalorder %v1265, 3
  %v1276 = vsel %vm1275, %v1257, %v1273
  %v1277 = vsel %vm1275, %v1258, %v1274
  %1278 = vst.msk [vmem:[%s8] sm:$0xff] %vm38, %v1276
  %1279 = vst.msk [vmem:[%s8 + $0x8] sm:$0xff] %vm38, %v1277
  // Predicated region
  $region30: #{tpu_custom_call.1} parent=0 // pred_check
    _
  $region31: #{tpu_custom_call.1} parent=0 // pred_check_branch
    %1281 = sbr.rel (0) target = $region33
  $region32: #{tpu_custom_call.1} parent=0 // pred_region
    _
  $region33: #{tpu_custom_call.1} parent=0 // pred_fallthru
    _
  // Predicated region
  $region34: #{tpu_custom_call.1} parent=0 // pred_check
    _
  $region35: #{tpu_custom_call.1} parent=0 // pred_check_branch
    %1283 = sbr.rel (0) target = $region37
  $region36: #{tpu_custom_call.1} parent=0 // pred_region
    _
  $region37: #{tpu_custom_call.1} parent=0 // pred_fallthru
    _
  // Predicated region
  $region38: #{tpu_custom_call.1} parent=0 // pred_check
    _
  $region39: #{tpu_custom_call.1} parent=0 // pred_check_branch
    %1285 = sbr.rel (0) target = $region41
  $region40: #{tpu_custom_call.1} parent=0 // pred_region
    _
  $region41: #{tpu_custom_call.1} parent=0 // pred_fallthru
    _
  // Predicated region
  $region42: #{tpu_custom_call.1} parent=0 // pred_check
    _
  $region43: #{tpu_custom_call.1} parent=0 // pred_check_branch
    %1287 = sbr.rel (0) target = $region45
  $region44: #{tpu_custom_call.1} parent=0 // pred_region
    _
  $region45: #{tpu_custom_call.1} parent=0 // pred_fallthru
    _

</llo_original>
